<compile_context>
chip_gen: v7x
topology: tpu7x:2x2x1
jax: 0.10.0
libtpu: 0.0.40
codegen_flags: <defaults>
</compile_context>

<pallas_src>
import jax
import jax.numpy as jnp
from jax.experimental import pallas as pl
from jax.experimental.pallas import tpu as pltpu

_LANE = 128
_SUBLANE = 8


def _round_up(x, m):
    return ((x + m - 1) // m) * m


# ----------------------------------------------------------------------------- kernel

def _make_mlp_kernel(num_hidden):
    """Kernel computing the whole MLP for one row-tile of x.

    refs = (x, w0, b0, w1, b1, ..., w_last, b_last, out)
      hidden layer l : h   = relu(h @ W_l + b_l)      (BN scale folded into W/b,
                                                       BN shift folded into next bias)
      final layer    : out = h @ W_last + b_last
    Weights are bf16 (MXU), accumulation and the epilogue are f32.
    """
    def kernel(*refs):
        x_ref = refs[0]
        o_ref = refs[-1]
        h = x_ref[...].astype(jnp.bfloat16)                  # f32 tile -> bf16 in-kernel
        idx = 1
        for _ in range(num_hidden):
            w_ref = refs[idx]
            b_ref = refs[idx + 1]
            idx += 2
            y = jnp.dot(h, w_ref[...], preferred_element_type=jnp.float32)
            h = jnp.maximum(y + b_ref[...], 0.0).astype(jnp.bfloat16)   # bias+ReLU epilogue
        w_ref = refs[idx]
        b_ref = refs[idx + 1]
        y = jnp.dot(h, w_ref[...], preferred_element_type=jnp.float32)
        o_ref[...] = y + b_ref[...]                          # (tm, nclass) f32, direct store
    return kernel


def _const_index_map(i):
    return (0, 0)


# ----------------------------------------------------------------------------- wrapper

def _choose_tm(n):
    """>= 8 row tiles when possible (>= 2 per TensorCore on v7x), tile capped at 1024 rows
    (good HBM-roofline fraction on v5e/v6e), floor of 8 (sublane)."""
    tm = _round_up((n + 7) // 8, _SUBLANE)
    return max(_SUBLANE, min(1024, tm))


def _vmem_limit_bytes(kparams, tm, fin, nclass, weight_bufs):
    resident = sum(int(w.size) * 2 + int(b.size) * 4 for (w, b) in kparams) * weight_bufs
    x_tile = 2 * tm * fin * 4                                  # f32 input tile, double-buffered
    out_tile = 2 * tm * _round_up(nclass, _LANE) * 4           # output tile (lane-padded in VMEM)
    hmax = max(int(w.shape[1]) for (w, _) in kparams)
    act = 2 * tm * _round_up(hmax, _LANE) * 4                  # in-kernel activation temporaries
    need = resident + x_tile + out_tile + act
    # TODO(synk): fall back to K/N-tiled weights (extra grid axis + f32 accumulator scratch)
    # when the resident footprint exceeds ~40 MiB (v7x has only 64 MiB VMEM per TC).
    assert need <= (40 << 20), "resident weights exceed the portable VMEM budget"
    budget = int(need * 1.5) + (8 << 20)
    return max(32 << 20, min(budget, 56 << 20))


def _mlp_pallas(x, kparams, nclass, tm, single_buffer_weights):
    """Single fused pallas_call over row tiles of the (unpadded) input."""
    n, f = x.shape
    num_hidden = len(kparams) - 1

    weight_spec_kwargs = {}
    if single_buffer_weights and hasattr(pl, "Buffered"):
        # Constant block index -> double-buffering the weights only doubles their VMEM
        # footprint; request a single buffer.
        weight_spec_kwargs["pipeline_mode"] = pl.Buffered(1)

    in_specs = [pl.BlockSpec((tm, f), lambda i: (i, 0))]       # x: tiled over rows only
    args = [x]
    for (w, b) in kparams:                                     # resident weights/biases
        in_specs.append(pl.BlockSpec(w.shape, _const_index_map, **weight_spec_kwargs))
        in_specs.append(pl.BlockSpec(b.shape, _const_index_map, **weight_spec_kwargs))
        args.extend([w, b])
    out_specs = pl.BlockSpec((tm, nclass), lambda i: (i, 0))   # (tm, nclass): no padded writeback

    nbuf = 1 if weight_spec_kwargs else 2
    return pl.pallas_call(
        _make_mlp_kernel(num_hidden),
        out_shape=jax.ShapeDtypeStruct((n, nclass), jnp.float32),
        grid_spec=pltpu.PrefetchScalarGridSpec(
            num_scalar_prefetch=0,
            grid=(pl.cdiv(n, tm),),                            # edge tile masked by Pallas
            in_specs=in_specs,
            out_specs=out_specs,
        ),
        compiler_params=pltpu.CompilerParams(
            # row-tile axis is independent -> shards across the 2 TCs on v7x
            dimension_semantics=("parallel",),
            vmem_limit_bytes=_vmem_limit_bytes(kparams, tm, f, nclass, nbuf),
        ),
    )(*args)


_SINGLE_BUFFER_WEIGHTS_OK = True


def mlp_forward(x, kparams, nclass):
    global _SINGLE_BUFFER_WEIGHTS_OK
    n = x.shape[0]
    tm = _choose_tm(n)
    if _SINGLE_BUFFER_WEIGHTS_OK:
        try:
            return jax.block_until_ready(_mlp_pallas(x, kparams, nclass, tm, True))
        except Exception:
            # pipeline_mode=pl.Buffered(1) not supported on this jax version; use defaults.
            _SINGLE_BUFFER_WEIGHTS_OK = False
    return _mlp_pallas(x, kparams, nclass, tm, False)


# ----------------------------------------------------------------------------- params

def init_mlp_params(key, nlayer, nfeat, nhidden, nclass):
    """Torch-default init: nn.Linear uniform(+-1/sqrt(fan_in)) weight & bias;
    nn.BatchNorm1d gamma=1, beta=0, running_mean=0, running_var=1, eps=1e-5 (eval)."""
    dims = [nfeat, nclass] if nlayer == 1 else [nfeat] + [nhidden] * (nlayer - 1) + [nclass]
    params = []
    for li in range(len(dims) - 1):
        fan_in, fan_out = dims[li], dims[li + 1]
        key, kw, kb = jax.random.split(key, 3)
        bound = 1.0 / float(fan_in) ** 0.5
        # torch stores weight as (out, in); keep transposed (in, out) for the kernel.
        w_t = jax.random.uniform(kw, (fan_in, fan_out), jnp.float32, -bound, bound)
        b = jax.random.uniform(kb, (fan_out,), jnp.float32, -bound, bound)
        layer = {"w_t": w_t, "b": b}
        if li < len(dims) - 2:                     # hidden layer -> BatchNorm1d (eval)
            eps = 1e-5
            gamma = jnp.ones((fan_out,), jnp.float32)
            beta = jnp.zeros((fan_out,), jnp.float32)
            rmean = jnp.zeros((fan_out,), jnp.float32)
            rvar = jnp.ones((fan_out,), jnp.float32)
            scale = gamma / jnp.sqrt(rvar + eps)
            shift = beta - rmean * scale
            layer["scale"] = scale
            layer["shift"] = shift
        params.append(layer)
    return params


def prepare_kernel_params(params):
    """Fold eval-mode BN into the Linear weights (scale) and into the *next* layer's
    bias (shift); zero-pad only the *hidden* feature dims to multiples of 128 lanes
    (first fan_in and last fan_out stay unpadded so x / out need no pad copies);
    cast weights to bf16."""
    kparams = []
    carry_shift = None                              # BN shift of the previous hidden layer
    nlay = len(params)
    for li, p in enumerate(params):
        w = p["w_t"]                                # (fan_in, fan_out) f32
        b = p["b"]                                  # (fan_out,) f32
        if "scale" in p:
            scale = p["scale"]
            # relu(z)*scale == relu(z*scale) requires scale > 0; holds for default BN init.
            # TODO(synk): for trained BN with non-positive gamma keep scale in the epilogue.
            assert float(jnp.min(scale)) > 0.0, "BN-scale fold requires scale > 0"
            w = w * scale[None, :]
            b = b * scale
        if carry_shift is not None:                 # fold previous BN shift into this bias
            b = b + carry_shift @ w
        carry_shift = p.get("shift", None)

        fan_in, fan_out = w.shape
        # first layer keeps fan_in unpadded (x streamed unpadded from HBM);
        # last layer keeps fan_out unpadded (output block is (tm, nclass), no post-slice).
        # NOTE: for hidden widths >= 128 on v6e/v7x, padding to multiples of 256 would fill
        # the 256x256 MXU; not worth it for narrow hidden dims (memory/latency-bound).
        # TODO(synk): optional fp8 weights on v7x once the kernel becomes MXU-bound.
        in_pad = fan_in if li == 0 else _round_up(fan_in, _LANE)
        out_pad = fan_out if li == nlay - 1 else _round_up(fan_out, _LANE)
        w_pad = jnp.zeros((in_pad, out_pad), jnp.bfloat16).at[:fan_in, :fan_out].set(
            w.astype(jnp.bfloat16))
        b_pad = jnp.zeros((1, out_pad), jnp.float32).at[0, :fan_out].set(b)
        kparams.append((w_pad, b_pad))
    return kparams


def mlp_reference(x, params):
    """Pure-JAX f32 reference with the original torch eval-mode semantics."""
    h = x
    for p in params[:-1]:
        h = jnp.maximum(h @ p["w_t"] + p["b"], 0.0) * p["scale"] + p["shift"]
    return h @ params[-1]["w_t"] + params[-1]["b"]


# ----------------------------------------------------------------------------- main

if __name__ == "__main__":
    nlayer, nfeat, nhidden, nclass = 3, 32, 64, 8
    n_nodes = 100                                   # deliberately not a multiple of the tile

    key = jax.random.PRNGKey(0)
    kx, kp = jax.random.split(key)
    x = jax.random.normal(kx, (n_nodes, nfeat), jnp.float32)
    params = init_mlp_params(kp, nlayer, nfeat, nhidden, nclass)
    kparams = prepare_kernel_params(params)

    out = mlp_forward(x, kparams, nclass)
    out = jax.block_until_ready(out)
    assert out.shape == (n_nodes, nclass)

    # (1) tight check: same folded/padded bf16 math in plain XLA
    hb = x.astype(jnp.bfloat16)
    for (w, b) in kparams[:-1]:
        hb = jnp.maximum(
            jnp.dot(hb, w, preferred_element_type=jnp.float32) + b, 0.0
        ).astype(jnp.bfloat16)
    ref_bf16 = jnp.dot(hb, kparams[-1][0], preferred_element_type=jnp.float32) + kparams[-1][1]
    assert jnp.allclose(out, ref_bf16, atol=2e-3, rtol=2e-3), \
        float(jnp.max(jnp.abs(out - ref_bf16)))

    # (2) loose check: exact f32 eval-mode semantics of the torch module
    ref_f32 = mlp_reference(x, params)
    assert jnp.allclose(out, ref_f32, atol=5e-2, rtol=5e-2), \
        float(jnp.max(jnp.abs(out - ref_f32)))

    print("KERNEL_OK")
</pallas_src>

<mosaic_0001>
module attributes {stable_mosaic.version = 11 : i64} {
  func.func @kernel(%arg0: i32, %arg1: memref<16x32xf32, #tpu.memory_space<vmem>>, %arg2: memref<32x128xbf16, #tpu.memory_space<vmem>>, %arg3: memref<1x128xf32, #tpu.memory_space<vmem>>, %arg4: memref<128x128xbf16, #tpu.memory_space<vmem>>, %arg5: memref<1x128xf32, #tpu.memory_space<vmem>>, %arg6: memref<128x8xbf16, #tpu.memory_space<vmem>>, %arg7: memref<1x8xf32, #tpu.memory_space<vmem>>, %arg8: memref<16x8xf32, #tpu.memory_space<vmem>>) attributes {dimension_semantics = [#tpu.dimension_semantics<parallel>], iteration_bounds = array<i64: 7>, scalar_prefetch = 0 : i64, scratch_operands = 0 : i64, tpu.core_type = #tpu.core_type<tc>, window_params = [{transform_indices = @transform_0, window_bounds = array<i64: 16, 32>}, {pipeline_mode = #tpu.pipeline_mode<synchronous>, transform_indices = @transform_1, window_bounds = array<i64: 32, 128>}, {pipeline_mode = #tpu.pipeline_mode<synchronous>, transform_indices = @transform_2, window_bounds = array<i64: 1, 128>}, {pipeline_mode = #tpu.pipeline_mode<synchronous>, transform_indices = @transform_3, window_bounds = array<i64: 128, 128>}, {pipeline_mode = #tpu.pipeline_mode<synchronous>, transform_indices = @transform_4, window_bounds = array<i64: 1, 128>}, {pipeline_mode = #tpu.pipeline_mode<synchronous>, transform_indices = @transform_5, window_bounds = array<i64: 128, 8>}, {pipeline_mode = #tpu.pipeline_mode<synchronous>, transform_indices = @transform_6, window_bounds = array<i64: 1, 8>}, {transform_indices = @transform_7, window_bounds = array<i64: 16, 8>}]} {
    %c0 = arith.constant 0 : index
    %c0_0 = arith.constant 0 : index
    %0 = vector.load %arg1[%c0, %c0_0] : memref<16x32xf32, #tpu.memory_space<vmem>>, vector<16x32xf32>
    %1 = arith.truncf %0 : vector<16x32xf32> to vector<16x32xbf16>
    %c0_1 = arith.constant 0 : index
    %c0_2 = arith.constant 0 : index
    %2 = vector.load %arg2[%c0_1, %c0_2] : memref<32x128xbf16, #tpu.memory_space<vmem>>, vector<32x128xbf16>
    %cst = arith.constant dense<0.000000e+00> : vector<16x128xf32>
    %3 = tpu.matmul %1, %2, %cst {dimension_numbers = #tpu.dot_dimension_numbers<[1], [0], [0], [1], [0, 0, 1, 1], [], []>} : vector<16x32xbf16>, vector<32x128xbf16>, vector<16x128xf32> -> vector<16x128xf32>
    %c0_3 = arith.constant 0 : index
    %c0_4 = arith.constant 0 : index
    %4 = vector.load %arg3[%c0_3, %c0_4] : memref<1x128xf32, #tpu.memory_space<vmem>>, vector<1x128xf32>
    %5 = vector.broadcast %4 : vector<1x128xf32> to vector<16x128xf32>
    %6 = arith.addf %3, %5 : vector<16x128xf32>
    %cst_5 = arith.constant 0.000000e+00 : f32
    %7 = vector.broadcast %cst_5 : f32 to vector<16x128xf32>
    %8 = arith.maximumf %6, %7 : vector<16x128xf32>
    %9 = arith.truncf %8 : vector<16x128xf32> to vector<16x128xbf16>
    %c0_6 = arith.constant 0 : index
    %c0_7 = arith.constant 0 : index
    %10 = vector.load %arg4[%c0_6, %c0_7] : memref<128x128xbf16, #tpu.memory_space<vmem>>, vector<128x128xbf16>
    %cst_8 = arith.constant dense<0.000000e+00> : vector<16x128xf32>
    %11 = tpu.matmul %9, %10, %cst_8 {dimension_numbers = #tpu.dot_dimension_numbers<[1], [0], [0], [1], [0, 0, 1, 1], [], []>} : vector<16x128xbf16>, vector<128x128xbf16>, vector<16x128xf32> -> vector<16x128xf32>
    %c0_9 = arith.constant 0 : index
    %c0_10 = arith.constant 0 : index
    %12 = vector.load %arg5[%c0_9, %c0_10] : memref<1x128xf32, #tpu.memory_space<vmem>>, vector<1x128xf32>
    %13 = vector.broadcast %12 : vector<1x128xf32> to vector<16x128xf32>
    %14 = arith.addf %11, %13 : vector<16x128xf32>
    %cst_11 = arith.constant 0.000000e+00 : f32
    %15 = vector.broadcast %cst_11 : f32 to vector<16x128xf32>
    %16 = arith.maximumf %14, %15 : vector<16x128xf32>
    %17 = arith.truncf %16 : vector<16x128xf32> to vector<16x128xbf16>
    %c0_12 = arith.constant 0 : index
    %c0_13 = arith.constant 0 : index
    %18 = vector.load %arg6[%c0_12, %c0_13] : memref<128x8xbf16, #tpu.memory_space<vmem>>, vector<128x8xbf16>
    %cst_14 = arith.constant dense<0.000000e+00> : vector<16x8xf32>
    %19 = tpu.matmul %17, %18, %cst_14 {dimension_numbers = #tpu.dot_dimension_numbers<[1], [0], [0], [1], [0, 0, 1, 1], [], []>} : vector<16x128xbf16>, vector<128x8xbf16>, vector<16x8xf32> -> vector<16x8xf32>
    %c0_15 = arith.constant 0 : index
    %c0_16 = arith.constant 0 : index
    %20 = vector.load %arg7[%c0_15, %c0_16] : memref<1x8xf32, #tpu.memory_space<vmem>>, vector<1x8xf32>
    %21 = vector.broadcast %20 : vector<1x8xf32> to vector<16x8xf32>
    %22 = arith.addf %19, %21 : vector<16x8xf32>
    %c0_17 = arith.constant 0 : index
    %c0_18 = arith.constant 0 : index
    %23 = vector.load %arg8[%c0_17, %c0_18] : memref<16x8xf32, #tpu.memory_space<vmem>>, vector<16x8xf32>
    tpu.vector_store %arg8[%c0_17, %c0_18], %22 {strides = array<i32>} : memref<16x8xf32, #tpu.memory_space<vmem>>, vector<16x8xf32>,
    return
  }
  func.func @transform_0(%arg0: i32) -> (i32, i32) {
    %c0_i32 = arith.constant 0 : i32
    %c0_i32_0 = arith.constant 0 : i32
    return %arg0, %c0_i32 : i32, i32
  }
  func.func @transform_1(%arg0: i32) -> (i32, i32) {
    %c0_i32 = arith.constant 0 : i32
    %c0_i32_0 = arith.constant 0 : i32
    %c0_i32_1 = arith.constant 0 : i32
    return %c0_i32, %c0_i32_0 : i32, i32
  }
  func.func @transform_2(%arg0: i32) -> (i32, i32) {
    %c0_i32 = arith.constant 0 : i32
    %c0_i32_0 = arith.constant 0 : i32
    %c0_i32_1 = arith.constant 0 : i32
    return %c0_i32, %c0_i32_0 : i32, i32
  }
  func.func @transform_3(%arg0: i32) -> (i32, i32) {
    %c0_i32 = arith.constant 0 : i32
    %c0_i32_0 = arith.constant 0 : i32
    %c0_i32_1 = arith.constant 0 : i32
    return %c0_i32, %c0_i32_0 : i32, i32
  }
  func.func @transform_4(%arg0: i32) -> (i32, i32) {
    %c0_i32 = arith.constant 0 : i32
    %c0_i32_0 = arith.constant 0 : i32
    %c0_i32_1 = arith.constant 0 : i32
    return %c0_i32, %c0_i32_0 : i32, i32
  }
  func.func @transform_5(%arg0: i32) -> (i32, i32) {
    %c0_i32 = arith.constant 0 : i32
    %c0_i32_0 = arith.constant 0 : i32
    %c0_i32_1 = arith.constant 0 : i32
    return %c0_i32, %c0_i32_0 : i32, i32
  }
  func.func @transform_6(%arg0: i32) -> (i32, i32) {
    %c0_i32 = arith.constant 0 : i32
    %c0_i32_0 = arith.constant 0 : i32
    %c0_i32_1 = arith.constant 0 : i32
    return %c0_i32, %c0_i32_0 : i32, i32
  }
  func.func @transform_7(%arg0: i32) -> (i32, i32) {
    %c0_i32 = arith.constant 0 : i32
    %c0_i32_0 = arith.constant 0 : i32
    return %arg0, %c0_i32 : i32, i32
  }
}

module attributes {stable_mosaic.version = 11 : i64} {
  func.func @kernel(%arg0: i32, %arg1: memref<16x32xf32, #tpu.memory_space<vmem>>, %arg2: memref<32x128xbf16, #tpu.memory_space<vmem>>, %arg3: memref<1x128xf32, #tpu.memory_space<vmem>>, %arg4: memref<128x128xbf16, #tpu.memory_space<vmem>>, %arg5: memref<1x128xf32, #tpu.memory_space<vmem>>, %arg6: memref<128x8xbf16, #tpu.memory_space<vmem>>, %arg7: memref<1x8xf32, #tpu.memory_space<vmem>>, %arg8: memref<16x8xf32, #tpu.memory_space<vmem>>) attributes {dimension_semantics = [#tpu.dimension_semantics<parallel>], iteration_bounds = array<i64: 7>, scalar_prefetch = 0 : i64, scratch_operands = 0 : i64, tpu.core_type = #tpu.core_type<tc>, window_params = [{transform_indices = @transform_0, window_bounds = array<i64: 16, 32>}, {pipeline_mode = #tpu.pipeline_mode<synchronous>, transform_indices = @transform_1, window_bounds = array<i64: 32, 128>}, {pipeline_mode = #tpu.pipeline_mode<synchronous>, transform_indices = @transform_2, window_bounds = array<i64: 1, 128>}, {pipeline_mode = #tpu.pipeline_mode<synchronous>, transform_indices = @transform_3, window_bounds = array<i64: 128, 128>}, {pipeline_mode = #tpu.pipeline_mode<synchronous>, transform_indices = @transform_4, window_bounds = array<i64: 1, 128>}, {pipeline_mode = #tpu.pipeline_mode<synchronous>, transform_indices = @transform_5, window_bounds = array<i64: 128, 8>}, {pipeline_mode = #tpu.pipeline_mode<synchronous>, transform_indices = @transform_6, window_bounds = array<i64: 1, 8>}, {transform_indices = @transform_7, window_bounds = array<i64: 16, 8>}]} {
    %c0 = arith.constant 0 : index
    %c0_0 = arith.constant 0 : index
    %0 = vector.load %arg1[%c0, %c0_0] : memref<16x32xf32, #tpu.memory_space<vmem>>, vector<16x32xf32>
    %1 = arith.truncf %0 : vector<16x32xf32> to vector<16x32xbf16>
    %c0_1 = arith.constant 0 : index
    %c0_2 = arith.constant 0 : index
    %2 = vector.load %arg2[%c0_1, %c0_2] : memref<32x128xbf16, #tpu.memory_space<vmem>>, vector<32x128xbf16>
    %cst = arith.constant dense<0.000000e+00> : vector<16x128xf32>
    %3 = tpu.matmul %1, %2, %cst {dimension_numbers = #tpu.dot_dimension_numbers<[1], [0], [0], [1], [0, 0, 1, 1], [], []>} : vector<16x32xbf16>, vector<32x128xbf16>, vector<16x128xf32> -> vector<16x128xf32>
    %c0_3 = arith.constant 0 : index
    %c0_4 = arith.constant 0 : index
    %4 = vector.load %arg3[%c0_3, %c0_4] : memref<1x128xf32, #tpu.memory_space<vmem>>, vector<1x128xf32>
    %5 = vector.broadcast %4 : vector<1x128xf32> to vector<16x128xf32>
    %6 = arith.addf %3, %5 : vector<16x128xf32>
    %cst_5 = arith.constant 0.000000e+00 : f32
    %7 = vector.broadcast %cst_5 : f32 to vector<16x128xf32>
    %8 = arith.maximumf %6, %7 : vector<16x128xf32>
    %9 = arith.truncf %8 : vector<16x128xf32> to vector<16x128xbf16>
    %c0_6 = arith.constant 0 : index
    %c0_7 = arith.constant 0 : index
    %10 = vector.load %arg4[%c0_6, %c0_7] : memref<128x128xbf16, #tpu.memory_space<vmem>>, vector<128x128xbf16>
    %cst_8 = arith.constant dense<0.000000e+00> : vector<16x128xf32>
    %11 = tpu.matmul %9, %10, %cst_8 {dimension_numbers = #tpu.dot_dimension_numbers<[1], [0], [0], [1], [0, 0, 1, 1], [], []>} : vector<16x128xbf16>, vector<128x128xbf16>, vector<16x128xf32> -> vector<16x128xf32>
    %c0_9 = arith.constant 0 : index
    %c0_10 = arith.constant 0 : index
    %12 = vector.load %arg5[%c0_9, %c0_10] : memref<1x128xf32, #tpu.memory_space<vmem>>, vector<1x128xf32>
    %13 = vector.broadcast %12 : vector<1x128xf32> to vector<16x128xf32>
    %14 = arith.addf %11, %13 : vector<16x128xf32>
    %cst_11 = arith.constant 0.000000e+00 : f32
    %15 = vector.broadcast %cst_11 : f32 to vector<16x128xf32>
    %16 = arith.maximumf %14, %15 : vector<16x128xf32>
    %17 = arith.truncf %16 : vector<16x128xf32> to vector<16x128xbf16>
    %c0_12 = arith.constant 0 : index
    %c0_13 = arith.constant 0 : index
    %18 = vector.load %arg6[%c0_12, %c0_13] : memref<128x8xbf16, #tpu.memory_space<vmem>>, vector<128x8xbf16>
    %cst_14 = arith.constant dense<0.000000e+00> : vector<16x8xf32>
    %19 = tpu.matmul %17, %18, %cst_14 {dimension_numbers = #tpu.dot_dimension_numbers<[1], [0], [0], [1], [0, 0, 1, 1], [], []>} : vector<16x128xbf16>, vector<128x8xbf16>, vector<16x8xf32> -> vector<16x8xf32>
    %c0_15 = arith.constant 0 : index
    %c0_16 = arith.constant 0 : index
    %20 = vector.load %arg7[%c0_15, %c0_16] : memref<1x8xf32, #tpu.memory_space<vmem>>, vector<1x8xf32>
    %21 = vector.broadcast %20 : vector<1x8xf32> to vector<16x8xf32>
    %22 = arith.addf %19, %21 : vector<16x8xf32>
    %c0_17 = arith.constant 0 : index
    %c0_18 = arith.constant 0 : index
    %23 = vector.load %arg8[%c0_17, %c0_18] : memref<16x8xf32, #tpu.memory_space<vmem>>, vector<16x8xf32>
    tpu.vector_store %arg8[%c0_17, %c0_18], %22 {strides = array<i32>} : memref<16x8xf32, #tpu.memory_space<vmem>>, vector<16x8xf32>,
    return
  }
  func.func @transform_0(%arg0: i32) -> (i32, i32) {
    %c0_i32 = arith.constant 0 : i32
    %c0_i32_0 = arith.constant 0 : i32
    return %arg0, %c0_i32 : i32, i32
  }
  func.func @transform_1(%arg0: i32) -> (i32, i32) {
    %c0_i32 = arith.constant 0 : i32
    %c0_i32_0 = arith.constant 0 : i32
    %c0_i32_1 = arith.constant 0 : i32
    return %c0_i32, %c0_i32_0 : i32, i32
  }
  func.func @transform_2(%arg0: i32) -> (i32, i32) {
    %c0_i32 = arith.constant 0 : i32
    %c0_i32_0 = arith.constant 0 : i32
    %c0_i32_1 = arith.constant 0 : i32
    return %c0_i32, %c0_i32_0 : i32, i32
  }
  func.func @transform_3(%arg0: i32) -> (i32, i32) {
    %c0_i32 = arith.constant 0 : i32
    %c0_i32_0 = arith.constant 0 : i32
    %c0_i32_1 = arith.constant 0 : i32
    return %c0_i32, %c0_i32_0 : i32, i32
  }
  func.func @transform_4(%arg0: i32) -> (i32, i32) {
    %c0_i32 = arith.constant 0 : i32
    %c0_i32_0 = arith.constant 0 : i32
    %c0_i32_1 = arith.constant 0 : i32
    return %c0_i32, %c0_i32_0 : i32, i32
  }
  func.func @transform_5(%arg0: i32) -> (i32, i32) {
    %c0_i32 = arith.constant 0 : i32
    %c0_i32_0 = arith.constant 0 : i32
    %c0_i32_1 = arith.constant 0 : i32
    return %c0_i32, %c0_i32_0 : i32, i32
  }
  func.func @transform_6(%arg0: i32) -> (i32, i32) {
    %c0_i32 = arith.constant 0 : i32
    %c0_i32_0 = arith.constant 0 : i32
    %c0_i32_1 = arith.constant 0 : i32
    return %c0_i32, %c0_i32_0 : i32, i32
  }
  func.func @transform_7(%arg0: i32) -> (i32, i32) {
    %c0_i32 = arith.constant 0 : i32
    %c0_i32_0 = arith.constant 0 : i32
    return %arg0, %c0_i32 : i32, i32
  }
}

</mosaic_0001>

<llo_original>
// kernel: tpu_custom_call.1
$region0: #{tpu_custom_call.1}
  #allocation0 [shape = 'u32[]', space=smem, size = 0x4, offset = 0x4, fixed_abs, tag = 'smem constant byte address 0x4 - core index']
  #allocation1 [shape = 'u32[144,128]{1,0:T(1,128)}', space=vmem, size = 0x12000, scoped, tag = 'internal scratch']
  %s0 = inlined_call_operand.vmem [shape: f32[100,32], index: 0, kind: input, shape index: {}]
  %s1 = inlined_call_operand.vmem [shape: bf16[32,128], index: 1, kind: input, shape index: {}]
  %s2 = inlined_call_operand.vmem [shape: f32[1,128], index: 2, kind: input, shape index: {}]
  %s3 = inlined_call_operand.vmem [shape: bf16[128,128], index: 3, kind: input, shape index: {}]
  %s4 = inlined_call_operand.vmem [shape: f32[1,128], index: 4, kind: input, shape index: {}]
  %s5 = inlined_call_operand.vmem [shape: bf16[128,8], index: 5, kind: input, shape index: {}]
  %s6 = inlined_call_operand.vmem [shape: f32[1,8], index: 6, kind: input, shape index: {}]
  %s7 = inlined_call_operand.vmem [shape: f32[100,8], index: 7, kind: output, shape index: {}]
  %s8 = sld [smem:[#allocation0]]
  $region109: #{tpu_custom_call.1} parent=0
    _
  %s10 = ssub.s32 1, %s8
  %s11 = scalar_select 0, %s10, %s8
  $region1: #{tpu_custom_call.1} parent=0
    #allocation2 [shape = 'u8[16384]{0}', space=vmem, size = 0x4000, scoped, tag = 'output window, operand 0']
    loop: start=0, step=1, limit=9
    $region2: #{tpu_custom_call.1} parent=1 // loop_pre_header
      _
    $region3: #{tpu_custom_call.1} parent=1 // loop_header
      %s13 = sphi 0, %s17
      %p14 = scmp.ge.s32.totalorder %s13, 9
      %s23 = sphi 0, %s25
      %s26 = sphi 0, %s23
      %s27 = sphi 0, %s26
      %s43 = sphi 0, %s27
      %s47 = sphi 0, %s47
      %s49 = sphi 0, %s47
      %s50 = sphi 0, %s49
      %s64 = sphi 0, %s50
      %s68 = sphi 0, %s68
      %s70 = sphi 0, %s68
      %s71 = sphi 0, %s70
      %s85 = sphi 0, %s71
      %s89 = sphi 0, %s89
      %s91 = sphi 0, %s89
      %s92 = sphi 0, %s91
      %s106 = sphi 0, %s92
      %s110 = sphi 0, %s110
      %s112 = sphi 0, %s110
      %s113 = sphi 0, %s112
      %s127 = sphi 0, %s113
      %s131 = sphi 0, %s131
      %s133 = sphi 0, %s131
      %s134 = sphi 0, %s133
      %s148 = sphi 0, %s134
      %s152 = sphi 0, %s152
      %s154 = sphi 0, %s152
      %s155 = sphi 0, %s154
      %s169 = sphi 0, %s155
      %s175 = sphi 0, %s177
      %s178 = sphi 0, %s175
      %s179 = sphi 0, %s178
      %s195 = sphi 0, %s179
    $region4: #{tpu_custom_call.1} parent=1 // loop_header_branch
      %16 = sbr.rel (%p14) target = $region8
    $region5: #{tpu_custom_call.1} parent=1 // loop_body
      %s18 = ssub.s32 %s13, 1
      %s19 = ssub.s32 %s13, 2
      %s20 = sadd.s32 %s13, 1
      %s21 = ssub.s32 %s13, %s20
      %p22 = scmp.eq.s32.totalorder %s21, 0
      %s24 = sadd.s32 %s23, 1
      %s25 = scalar_select %p22, %s23, %s24
      %p28 = pneg %p22
      %p29 = scmp.eq.s32.totalorder %s13, 6
      %p30 = por %p28, %p29
      %p31 = scmp.ne.s32.totalorder %s23, %s26
      %p32 = scmp.eq.s32.totalorder %s13, 0
      %p33 = por %p31, %p32
      %p34 = scmp.ne.s32.totalorder %s23, %s26
      %p35 = scmp.eq.s32.totalorder %s18, 6
      %p36 = por %p34, %p35
      %p37 = scmp.ne.s32.totalorder %s26, %s27
      %p38 = scmp.eq.s32.totalorder %s18, 0
      %p39 = por %p37, %p38
      %p40 = scmp.ne.s32.totalorder %s26, %s27
      %p41 = scmp.eq.s32.totalorder %s19, 6
      %p42 = por %p40, %p41
      %p44 = scmp.ne.s32.totalorder %s27, %s43
      %p45 = scmp.eq.s32.totalorder %s19, 0
      %p46 = por %p44, %p45
      %s48 = sadd.s32 %s47, 1
      %p51 = scmp.eq.s32.totalorder %s13, 6
      %p52 = scmp.ne.s32.totalorder %s47, %s49
      %p53 = scmp.eq.s32.totalorder %s13, 0
      %p54 = por %p52, %p53
      %p55 = scmp.ne.s32.totalorder %s47, %s49
      %p56 = scmp.eq.s32.totalorder %s18, 6
      %p57 = por %p55, %p56
      %p58 = scmp.ne.s32.totalorder %s49, %s50
      %p59 = scmp.eq.s32.totalorder %s18, 0
      %p60 = por %p58, %p59
      %p61 = scmp.ne.s32.totalorder %s49, %s50
      %p62 = scmp.eq.s32.totalorder %s19, 6
      %p63 = por %p61, %p62
      %p65 = scmp.ne.s32.totalorder %s50, %s64
      %p66 = scmp.eq.s32.totalorder %s19, 0
      %p67 = por %p65, %p66
      %s69 = sadd.s32 %s68, 1
      %p72 = scmp.eq.s32.totalorder %s13, 6
      %p73 = scmp.ne.s32.totalorder %s68, %s70
      %p74 = scmp.eq.s32.totalorder %s13, 0
      %p75 = por %p73, %p74
      %p76 = scmp.ne.s32.totalorder %s68, %s70
      %p77 = scmp.eq.s32.totalorder %s18, 6
      %p78 = por %p76, %p77
      %p79 = scmp.ne.s32.totalorder %s70, %s71
      %p80 = scmp.eq.s32.totalorder %s18, 0
      %p81 = por %p79, %p80
      %p82 = scmp.ne.s32.totalorder %s70, %s71
      %p83 = scmp.eq.s32.totalorder %s19, 6
      %p84 = por %p82, %p83
      %p86 = scmp.ne.s32.totalorder %s71, %s85
      %p87 = scmp.eq.s32.totalorder %s19, 0
      %p88 = por %p86, %p87
      %s90 = sadd.s32 %s89, 1
      %p93 = scmp.eq.s32.totalorder %s13, 6
      %p94 = scmp.ne.s32.totalorder %s89, %s91
      %p95 = scmp.eq.s32.totalorder %s13, 0
      %p96 = por %p94, %p95
      %p97 = scmp.ne.s32.totalorder %s89, %s91
      %p98 = scmp.eq.s32.totalorder %s18, 6
      %p99 = por %p97, %p98
      %p100 = scmp.ne.s32.totalorder %s91, %s92
      %p101 = scmp.eq.s32.totalorder %s18, 0
      %p102 = por %p100, %p101
      %p103 = scmp.ne.s32.totalorder %s91, %s92
      %p104 = scmp.eq.s32.totalorder %s19, 6
      %p105 = por %p103, %p104
      %p107 = scmp.ne.s32.totalorder %s92, %s106
      %p108 = scmp.eq.s32.totalorder %s19, 0
      %p109 = por %p107, %p108
      %s111 = sadd.s32 %s110, 1
      %p114 = scmp.eq.s32.totalorder %s13, 6
      %p115 = scmp.ne.s32.totalorder %s110, %s112
      %p116 = scmp.eq.s32.totalorder %s13, 0
      %p117 = por %p115, %p116
      %p118 = scmp.ne.s32.totalorder %s110, %s112
      %p119 = scmp.eq.s32.totalorder %s18, 6
      %p120 = por %p118, %p119
      %p121 = scmp.ne.s32.totalorder %s112, %s113
      %p122 = scmp.eq.s32.totalorder %s18, 0
      %p123 = por %p121, %p122
      %p124 = scmp.ne.s32.totalorder %s112, %s113
      %p125 = scmp.eq.s32.totalorder %s19, 6
      %p126 = por %p124, %p125
      %p128 = scmp.ne.s32.totalorder %s113, %s127
      %p129 = scmp.eq.s32.totalorder %s19, 0
      %p130 = por %p128, %p129
      %s132 = sadd.s32 %s131, 1
      %p135 = scmp.eq.s32.totalorder %s13, 6
      %p136 = scmp.ne.s32.totalorder %s131, %s133
      %p137 = scmp.eq.s32.totalorder %s13, 0
      %p138 = por %p136, %p137
      %p139 = scmp.ne.s32.totalorder %s131, %s133
      %p140 = scmp.eq.s32.totalorder %s18, 6
      %p141 = por %p139, %p140
      %p142 = scmp.ne.s32.totalorder %s133, %s134
      %p143 = scmp.eq.s32.totalorder %s18, 0
      %p144 = por %p142, %p143
      %p145 = scmp.ne.s32.totalorder %s133, %s134
      %p146 = scmp.eq.s32.totalorder %s19, 6
      %p147 = por %p145, %p146
      %p149 = scmp.ne.s32.totalorder %s134, %s148
      %p150 = scmp.eq.s32.totalorder %s19, 0
      %p151 = por %p149, %p150
      %s153 = sadd.s32 %s152, 1
      %p156 = scmp.eq.s32.totalorder %s13, 6
      %p157 = scmp.ne.s32.totalorder %s152, %s154
      %p158 = scmp.eq.s32.totalorder %s13, 0
      %p159 = por %p157, %p158
      %p160 = scmp.ne.s32.totalorder %s152, %s154
      %p161 = scmp.eq.s32.totalorder %s18, 6
      %p162 = por %p160, %p161
      %p163 = scmp.ne.s32.totalorder %s154, %s155
      %p164 = scmp.eq.s32.totalorder %s18, 0
      %p165 = por %p163, %p164
      %p166 = scmp.ne.s32.totalorder %s154, %s155
      %p167 = scmp.eq.s32.totalorder %s19, 6
      %p168 = por %p166, %p167
      %p170 = scmp.ne.s32.totalorder %s155, %s169
      %p171 = scmp.eq.s32.totalorder %s19, 0
      %p172 = por %p170, %p171
      %s173 = ssub.s32 %s13, %s20
      %p174 = scmp.eq.s32.totalorder %s173, 0
      %s176 = sadd.s32 %s175, 1
      %s177 = scalar_select %p174, %s175, %s176
      %p180 = pneg %p174
      %p181 = scmp.eq.s32.totalorder %s13, 6
      %p182 = por %p180, %p181
      %p183 = scmp.ne.s32.totalorder %s175, %s178
      %p184 = scmp.eq.s32.totalorder %s13, 0
      %p185 = por %p183, %p184
      %p186 = scmp.ne.s32.totalorder %s175, %s178
      %p187 = scmp.eq.s32.totalorder %s18, 6
      %p188 = por %p186, %p187
      %p189 = scmp.ne.s32.totalorder %s178, %s179
      %p190 = scmp.eq.s32.totalorder %s18, 0
      %p191 = por %p189, %p190
      %p192 = scmp.ne.s32.totalorder %s178, %s179
      %p193 = scmp.eq.s32.totalorder %s19, 6
      %p194 = por %p192, %p193
      %p196 = scmp.ne.s32.totalorder %s179, %s195
      %p197 = scmp.eq.s32.totalorder %s19, 0
      %p198 = por %p196, %p197
      %p199 = scmp.le.s32.totalorder 1, %s13
      %p200 = scmp.lt.s32.totalorder %s13, 8
      %p201 = pnand %p199, %p200
      %p202 = pneg %p201
      // Predicated region
      $region9: #{tpu_custom_call.1} parent=5 // pred_check
        _
      $region10: #{tpu_custom_call.1} parent=5 // pred_check_branch
        %204 = sbr.rel (%p201) target = $region12
      $region11: #{tpu_custom_call.1} parent=5 // pred_region
        %s205 = ssub.s32 %s13, 1
        // Predicated region
        $region13: #{tpu_custom_call.1} parent=11 // pred_check
          %p206 = pneg %p60
        $region14: #{tpu_custom_call.1} parent=11 // pred_check_branch
          %208 = sbr.rel (%p206) target = $region16
        $region15: #{tpu_custom_call.1} parent=11 // pred_region
          _
        $region16: #{tpu_custom_call.1} parent=11 // pred_fallthru
          _
        // Predicated region
        $region17: #{tpu_custom_call.1} parent=11 // pred_check
          %p209 = pneg %p81
        $region18: #{tpu_custom_call.1} parent=11 // pred_check_branch
          %211 = sbr.rel (%p209) target = $region20
        $region19: #{tpu_custom_call.1} parent=11 // pred_region
          _
        $region20: #{tpu_custom_call.1} parent=11 // pred_fallthru
          _
        // Predicated region
        $region21: #{tpu_custom_call.1} parent=11 // pred_check
          %p212 = pneg %p102
        $region22: #{tpu_custom_call.1} parent=11 // pred_check_branch
          %214 = sbr.rel (%p212) target = $region24
        $region23: #{tpu_custom_call.1} parent=11 // pred_region
          _
        $region24: #{tpu_custom_call.1} parent=11 // pred_fallthru
          _
        // Predicated region
        $region25: #{tpu_custom_call.1} parent=11 // pred_check
          %p215 = pneg %p123
        $region26: #{tpu_custom_call.1} parent=11 // pred_check_branch
          %217 = sbr.rel (%p215) target = $region28
        $region27: #{tpu_custom_call.1} parent=11 // pred_region
          _
        $region28: #{tpu_custom_call.1} parent=11 // pred_fallthru
          _
        // Predicated region
        $region29: #{tpu_custom_call.1} parent=11 // pred_check
          %p218 = pneg %p144
        $region30: #{tpu_custom_call.1} parent=11 // pred_check_branch
          %220 = sbr.rel (%p218) target = $region32
        $region31: #{tpu_custom_call.1} parent=11 // pred_region
          _
        $region32: #{tpu_custom_call.1} parent=11 // pred_fallthru
          _
        // Predicated region
        $region33: #{tpu_custom_call.1} parent=11 // pred_check
          %p221 = pneg %p165
        $region34: #{tpu_custom_call.1} parent=11 // pred_check_branch
          %223 = sbr.rel (%p221) target = $region36
        $region35: #{tpu_custom_call.1} parent=11 // pred_region
          _
        $region36: #{tpu_custom_call.1} parent=11 // pred_fallthru
          _
      $region12: #{tpu_custom_call.1} parent=5 // pred_fallthru
        _
      %p224 = scmp.lt.s32.totalorder %s13, 7
      // Predicated region
      $region37: #{tpu_custom_call.1} parent=5 // pred_check
        %p225 = pneg %p224
      $region38: #{tpu_custom_call.1} parent=5 // pred_check_branch
        %227 = sbr.rel (%p225) target = $region40
      $region39: #{tpu_custom_call.1} parent=5 // pred_region
        // Predicated region
        $region41: #{tpu_custom_call.1} parent=39 // pred_check
          %p228 = pneg %p33
        $region42: #{tpu_custom_call.1} parent=39 // pred_check_branch
          %230 = sbr.rel (%p228) target = $region44
        $region43: #{tpu_custom_call.1} parent=39 // pred_region
          %s231 = smul.u32 2, %s13
          %s232 = ssub.s32 13, %s231
          %p233 = scmp.lt.s32.totalorder %s232, 2
          %s234 = scalar_select %p233, %s232, 2
          %s235 = smul.u32 128, %s234
          %p236 = scmp.lt.s32.totalorder %s231, 12
          %s237 = scalar_select %p236, %s231, 12
          %s238 = smul.addr %s237, 8
          %s239 = scalar_lea.vmem %s0, %s238
          %s240 = smul.u32 2, %s13
          %s241 = ssub.s32 13, %s240
          %p242 = scmp.lt.s32.totalorder %s241, 2
          %s243 = scalar_select %p242, %s241, 2
          %s244 = smul.u32 128, %s243
        $region44: #{tpu_custom_call.1} parent=39 // pred_fallthru
          _
      $region40: #{tpu_custom_call.1} parent=5 // pred_fallthru
        _
      %p245 = scmp.le.s32.totalorder 1, %s13
      %p246 = scmp.lt.s32.totalorder %s13, 8
      %p247 = pnand %p245, %p246
      %p248 = pneg %p247
      // Predicated region
      $region45: #{tpu_custom_call.1} parent=5 // pred_check
        _
      $region46: #{tpu_custom_call.1} parent=5 // pred_check_branch
        %250 = sbr.rel (%p247) target = $region48
      $region47: #{tpu_custom_call.1} parent=5 // pred_region
        %s251 = ssub.s32 %s13, 1
        %s252 = smul.u32 2, %s18
        %s253 = ssub.s32 13, %s252
        %p254 = scmp.lt.s32.totalorder %s253, 2
        %s255 = scalar_select %p254, %s253, 2
        %s256 = smul.u32 128, %s255
        %p257 = scmp.lt.s32.totalorder %s252, 12
        %s258 = scalar_select %p257, %s252, 12
        %s259 = smul.addr %s258, 8
        %s260 = scalar_lea.vmem %s0, %s259
        %p261 = pneg %p39
        %p262 = pneg %p36
        %p263 = pneg %p60
        %p264 = pneg %p57
        %p265 = pneg %p81
        %p266 = pneg %p78
        %p267 = pneg %p102
        %p268 = pneg %p99
        %p269 = pneg %p123
        %p270 = pneg %p120
        %p271 = pneg %p144
        %p272 = pneg %p141
        %p273 = pneg %p165
        %p274 = pneg %p162
        %p275 = pneg %p191
        %p276 = pneg %p188
        %s277 = sand.u32 %s178, 1
        %s278 = sand.u32 %s178, 1
        %s279 = smul.addr %s278, 16
        %s280 = scalar_lea.vmem [#allocation2], %s279
        %s281 = smul.u32 2, %s18
        %s282 = ssub.s32 13, %s281
        %p283 = scmp.lt.s32.totalorder %s282, 2
        %s284 = scalar_select %p283, %s282, 2
        %s285 = smul.u32 128, %s284
        %p286 = scmp.lt.s32.totalorder %s281, 12
        %s287 = scalar_select %p286, %s281, 12
        %s288 = smul.addr %s287, 8
        %s289 = scalar_lea.vmem %s0, %s288
        %s290 = smul.u32 2, %s18
        %s291 = ssub.s32 13, %s290
        %p292 = scmp.lt.s32.totalorder %s291, 2
        %s293 = scalar_select %p292, %s291, 2
        %s294 = smul.u32 128, %s293
        %s295 = smul.u32 2, %s18
        %s296 = ssub.s32 13, %s295
        %p297 = scmp.lt.s32.totalorder %s296, 2
        %s298 = scalar_select %p297, %s296, 2
        %s299 = smul.u32 128, %s298
        %v301 = vld [vmem:[%s289] sm:$0xff]
        %v302 = vld [vmem:[%s289 + $0x8] sm:$0xff]
        %v303 = vpack.c.bf16 %v302, %v301
        %v304 = vld [vmem:[%s1] sm:$0xf]
        %v305 = vld [vmem:[%s1 + $0x4] sm:$0xf]
        %v306 = vld [vmem:[%s1 + $0x8] sm:$0xf]
        %v307 = vld [vmem:[%s1 + $0xc] sm:$0xf]
        %v308 = vld [vmem:[%s2] sm:$0x1]
        %v310 = vlaneseq
        %v311 = vshrl.u32 %v310, 7
        %v312 = vsub.s32 0, %v311
        %v313 = vrot.slane %v308, %v312
        %v319 = vunpack.c.l.b16 %v304
        %v320 = vunpack.c.l.b16 %v305
        %v321 = vunpack.c.l.b16 %v306
        %v322 = vunpack.c.l.b16 %v307
        %v323 = vpack.c.b16 %v320, %v319
        %v324 = vpack.c.b16 %v322, %v321
        %vm327 = vcmask 261120
        %v329 = vsel %vm327, %v303, 0
        %331 = vmatprep.subr.bf16.mxu0 0
        %332 = vmatpush1.bf16.msra.mxu0 %v323
        %333 = vmatprep.subr.bf16.mxu0 0
        %334 = vmatpush1.bf16.msra.mxu0 %v324
        %335 = vmatprep.subr.bf16.mxu0 0
        %336 = vmatpush1.bf16.msra.mxu0 0
        %337 = vmatprep.subr.bf16.mxu0 0
        %338 = vmatpush1.bf16.msra.mxu0 0
        %339 = vmatprep.subr.bf16.mxu0 0
        %340 = vmatpush1.bf16.msra.mxu0 0
        %341 = vmatprep.subr.bf16.mxu0 0
        %342 = vmatpush1.bf16.msra.mxu0 0
        %343 = vmatprep.subr.bf16.mxu0 0
        %344 = vmatpush1.bf16.msra.mxu0 0
        %345 = vmatprep.subr.bf16.mxu0 0
        %346 = vmatpush1.bf16.msra.mxu0 0
        %347 = vmatprep.subr.bf16.mxu0 0
        %348 = vmatpush1.bf16.msra.mxu0 0
        %349 = vmatprep.subr.bf16.mxu0 0
        %350 = vmatpush1.bf16.msra.mxu0 0
        %351 = vmatprep.subr.bf16.mxu0 0
        %352 = vmatpush1.bf16.msra.mxu0 0
        %353 = vmatprep.subr.bf16.mxu0 0
        %354 = vmatpush1.bf16.msra.mxu0 0
        %355 = vmatprep.subr.bf16.mxu0 0
        %356 = vmatpush1.bf16.msra.mxu0 0
        %357 = vmatprep.subr.bf16.mxu0 0
        %358 = vmatpush1.bf16.msra.mxu0 0
        %359 = vmatprep.subr.bf16.mxu0 0
        %360 = vmatpush1.bf16.msra.mxu0 0
        %361 = vmatprep.subr.bf16.mxu0 0
        %362 = vmatpush1.bf16.msra.mxu0 0
        %363 = vmatprep.mubr.bf16.mxu0 0
        %364 = vmatmul.mubr.bf16.gmra.mrb[0].mxu0 %v329
        %v365 = vpop.f32.mrb[0].mxu0
        %v366 = vadd.f32 %v313, %v365
        %v367 = vpop.f32.mrb[0].mxu0
        %v368 = vpop.f32.mrb[0].mxu0
        %v369 = vadd.f32 %v313, %v368
        %v370 = vpop.f32.mrb[0].mxu0
        %371 = vdwg.mxu0
        %v372 = vmax.f32 %v366, 0.0
        %v373 = vmax.f32 %v369, 0.0
        %v374 = vpack.c.bf16 %v373, %v372
        %v375 = vld [vmem:[%s3] sm:$0xf]
        %v376 = vld [vmem:[%s3 + $0x4] sm:$0xf]
        %v377 = vld [vmem:[%s3 + $0x8] sm:$0xf]
        %v378 = vld [vmem:[%s3 + $0xc] sm:$0xf]
        %v379 = vld [vmem:[%s3 + $0x10] sm:$0xf]
        %v380 = vld [vmem:[%s3 + $0x14] sm:$0xf]
        %v381 = vld [vmem:[%s3 + $0x18] sm:$0xf]
        %v382 = vld [vmem:[%s3 + $0x1c] sm:$0xf]
        %v383 = vld [vmem:[%s3 + $0x20] sm:$0xf]
        %v384 = vld [vmem:[%s3 + $0x24] sm:$0xf]
        %v385 = vld [vmem:[%s3 + $0x28] sm:$0xf]
        %v386 = vld [vmem:[%s3 + $0x2c] sm:$0xf]
        %v387 = vld [vmem:[%s3 + $0x30] sm:$0xf]
        %v388 = vld [vmem:[%s3 + $0x34] sm:$0xf]
        %v389 = vld [vmem:[%s3 + $0x38] sm:$0xf]
        %v390 = vld [vmem:[%s3 + $0x3c] sm:$0xf]
        %v391 = vld [vmem:[%s4] sm:$0x1]
        %v393 = vlaneseq
        %v394 = vshrl.u32 %v393, 7
        %v395 = vsub.s32 0, %v394
        %v396 = vrot.slane %v391, %v395
        %v414 = vunpack.c.l.b16 %v375
        %v415 = vunpack.c.l.b16 %v376
        %v416 = vunpack.c.l.b16 %v377
        %v417 = vunpack.c.l.b16 %v378
        %v418 = vunpack.c.l.b16 %v379
        %v419 = vunpack.c.l.b16 %v380
        %v420 = vunpack.c.l.b16 %v381
        %v421 = vunpack.c.l.b16 %v382
        %v422 = vunpack.c.l.b16 %v383
        %v423 = vunpack.c.l.b16 %v384
        %v424 = vunpack.c.l.b16 %v385
        %v425 = vunpack.c.l.b16 %v386
        %v426 = vunpack.c.l.b16 %v387
        %v427 = vunpack.c.l.b16 %v388
        %v428 = vunpack.c.l.b16 %v389
        %v429 = vunpack.c.l.b16 %v390
        %v430 = vpack.c.b16 %v415, %v414
        %v431 = vpack.c.b16 %v417, %v416
        %v432 = vpack.c.b16 %v419, %v418
        %v433 = vpack.c.b16 %v421, %v420
        %v434 = vpack.c.b16 %v423, %v422
        %v435 = vpack.c.b16 %v425, %v424
        %v436 = vpack.c.b16 %v427, %v426
        %v437 = vpack.c.b16 %v429, %v428
        %446 = vmatprep.subr.bf16.mxu0 0
        %447 = vmatpush1.bf16.msra.mxu0 %v430
        %448 = vmatprep.subr.bf16.mxu0 0
        %449 = vmatpush1.bf16.msra.mxu0 %v431
        %450 = vmatprep.subr.bf16.mxu0 0
        %451 = vmatpush1.bf16.msra.mxu0 %v432
        %452 = vmatprep.subr.bf16.mxu0 0
        %453 = vmatpush1.bf16.msra.mxu0 %v433
        %454 = vmatprep.subr.bf16.mxu0 0
        %455 = vmatpush1.bf16.msra.mxu0 %v434
        %456 = vmatprep.subr.bf16.mxu0 0
        %457 = vmatpush1.bf16.msra.mxu0 %v435
        %458 = vmatprep.subr.bf16.mxu0 0
        %459 = vmatpush1.bf16.msra.mxu0 %v436
        %460 = vmatprep.subr.bf16.mxu0 0
        %461 = vmatpush1.bf16.msra.mxu0 %v437
        %462 = vmatprep.subr.bf16.mxu0 0
        %463 = vmatpush1.bf16.msra.mxu0 0
        %464 = vmatprep.subr.bf16.mxu0 0
        %465 = vmatpush1.bf16.msra.mxu0 0
        %466 = vmatprep.subr.bf16.mxu0 0
        %467 = vmatpush1.bf16.msra.mxu0 0
        %468 = vmatprep.subr.bf16.mxu0 0
        %469 = vmatpush1.bf16.msra.mxu0 0
        %470 = vmatprep.subr.bf16.mxu0 0
        %471 = vmatpush1.bf16.msra.mxu0 0
        %472 = vmatprep.subr.bf16.mxu0 0
        %473 = vmatpush1.bf16.msra.mxu0 0
        %474 = vmatprep.subr.bf16.mxu0 0
        %475 = vmatpush1.bf16.msra.mxu0 0
        %476 = vmatprep.subr.bf16.mxu0 0
        %477 = vmatpush1.bf16.msra.mxu0 0
        %478 = vmatprep.mubr.bf16.mxu0 0
        %479 = vmatmul.mubr.bf16.gmra.mrb[0].mxu0 %v374
        %v480 = vpop.f32.mrb[0].mxu0
        %v481 = vadd.f32 %v396, %v480
        %v482 = vpop.f32.mrb[0].mxu0
        %v483 = vpop.f32.mrb[0].mxu0
        %v484 = vadd.f32 %v396, %v483
        %v485 = vpop.f32.mrb[0].mxu0
        %486 = vdwg.mxu0
        %v487 = vmax.f32 %v481, 0.0
        %v488 = vmax.f32 %v484, 0.0
        %v489 = vpack.c.bf16 %v488, %v487
        %v490 = vld [vmem:[%s5] sm:$0xf]
        %v491 = vld [vmem:[%s5 + $0x4] sm:$0xf]
        %v492 = vld [vmem:[%s5 + $0x8] sm:$0xf]
        %v493 = vld [vmem:[%s5 + $0xc] sm:$0xf]
        %v494 = vld [vmem:[%s5 + $0x10] sm:$0xf]
        %v495 = vld [vmem:[%s5 + $0x14] sm:$0xf]
        %v496 = vld [vmem:[%s5 + $0x18] sm:$0xf]
        %v497 = vld [vmem:[%s5 + $0x1c] sm:$0xf]
        %v498 = vld [vmem:[%s5 + $0x20] sm:$0xf]
        %v499 = vld [vmem:[%s5 + $0x24] sm:$0xf]
        %v500 = vld [vmem:[%s5 + $0x28] sm:$0xf]
        %v501 = vld [vmem:[%s5 + $0x2c] sm:$0xf]
        %v502 = vld [vmem:[%s5 + $0x30] sm:$0xf]
        %v503 = vld [vmem:[%s5 + $0x34] sm:$0xf]
        %v504 = vld [vmem:[%s5 + $0x38] sm:$0xf]
        %v505 = vld [vmem:[%s5 + $0x3c] sm:$0xf]
        %v506 = vld [vmem:[%s6] sm:$0x1]
        %v508 = vlaneseq
        %v509 = vshrl.u32 %v508, 7
        %v510 = vsub.s32 0, %v509
        %v511 = vrot.slane %v506, %v510
        %v529 = vunpack.c.l.b16 %v490
        %v530 = vunpack.c.l.b16 %v491
        %v531 = vunpack.c.l.b16 %v492
        %v532 = vunpack.c.l.b16 %v493
        %v533 = vunpack.c.l.b16 %v494
        %v534 = vunpack.c.l.b16 %v495
        %v535 = vunpack.c.l.b16 %v496
        %v536 = vunpack.c.l.b16 %v497
        %v537 = vunpack.c.l.b16 %v498
        %v538 = vunpack.c.l.b16 %v499
        %v539 = vunpack.c.l.b16 %v500
        %v540 = vunpack.c.l.b16 %v501
        %v541 = vunpack.c.l.b16 %v502
        %v542 = vunpack.c.l.b16 %v503
        %v543 = vunpack.c.l.b16 %v504
        %v544 = vunpack.c.l.b16 %v505
        %v545 = vpack.c.b16 %v530, %v529
        %v546 = vpack.c.b16 %v532, %v531
        %v547 = vpack.c.b16 %v534, %v533
        %v548 = vpack.c.b16 %v536, %v535
        %v549 = vpack.c.b16 %v538, %v537
        %v550 = vpack.c.b16 %v540, %v539
        %v551 = vpack.c.b16 %v542, %v541
        %v552 = vpack.c.b16 %v544, %v543
        %561 = vmatprep.subr.bf16.mxu0 0
        %562 = vmatpush1.bf16.msra.mxu0 %v545
        %563 = vmatprep.subr.bf16.mxu0 0
        %564 = vmatpush1.bf16.msra.mxu0 %v546
        %565 = vmatprep.subr.bf16.mxu0 0
        %566 = vmatpush1.bf16.msra.mxu0 %v547
        %567 = vmatprep.subr.bf16.mxu0 0
        %568 = vmatpush1.bf16.msra.mxu0 %v548
        %569 = vmatprep.subr.bf16.mxu0 0
        %570 = vmatpush1.bf16.msra.mxu0 %v549
        %571 = vmatprep.subr.bf16.mxu0 0
        %572 = vmatpush1.bf16.msra.mxu0 %v550
        %573 = vmatprep.subr.bf16.mxu0 0
        %574 = vmatpush1.bf16.msra.mxu0 %v551
        %575 = vmatprep.subr.bf16.mxu0 0
        %576 = vmatpush1.bf16.msra.mxu0 %v552
        %577 = vmatprep.subr.bf16.mxu0 0
        %578 = vmatpush1.bf16.msra.mxu0 0
        %579 = vmatprep.subr.bf16.mxu0 0
        %580 = vmatpush1.bf16.msra.mxu0 0
        %581 = vmatprep.subr.bf16.mxu0 0
        %582 = vmatpush1.bf16.msra.mxu0 0
        %583 = vmatprep.subr.bf16.mxu0 0
        %584 = vmatpush1.bf16.msra.mxu0 0
        %585 = vmatprep.subr.bf16.mxu0 0
        %586 = vmatpush1.bf16.msra.mxu0 0
        %587 = vmatprep.subr.bf16.mxu0 0
        %588 = vmatpush1.bf16.msra.mxu0 0
        %589 = vmatprep.subr.bf16.mxu0 0
        %590 = vmatpush1.bf16.msra.mxu0 0
        %591 = vmatprep.subr.bf16.mxu0 0
        %592 = vmatpush1.bf16.msra.mxu0 0
        %593 = vmatprep.mubr.bf16.mxu0 0
        %594 = vmatmul.mubr.bf16.gmra.mrb[0].mxu0 %v489
        %v595 = vpop.f32.mrb[0].mxu0
        %v596 = vadd.f32 %v511, %v595
        %v597 = vpop.f32.mrb[0].mxu0
        %v598 = vpop.f32.mrb[0].mxu0
        %v599 = vadd.f32 %v511, %v598
        %v600 = vpop.f32.mrb[0].mxu0
        %601 = vdwg.mxu0
        %vm602 = vcmask 64512
        %603 = vst.msk [vmem:[%s280] sm:$0xff] %vm602, %v596
        %604 = vst.msk [vmem:[%s280 + $0x8] sm:$0xff] %vm602, %v599
        %s605 = sand.u32 %s178, 1
        %s606 = sand.u32 %s178, 1
        %s607 = smul.addr %s606, 16
        %s608 = scalar_lea.vmem [#allocation2], %s607
        // Predicated region
        $region49: #{tpu_custom_call.1} parent=47 // pred_check
          %p609 = pneg %p188
        $region50: #{tpu_custom_call.1} parent=47 // pred_check_branch
          %611 = sbr.rel (%p609) target = $region52
        $region51: #{tpu_custom_call.1} parent=47 // pred_region
          %s612 = smul.u32 2, %s18
          %s613 = ssub.s32 13, %s612
          %p614 = scmp.lt.s32.totalorder %s613, 2
          %s615 = scalar_select %p614, %s613, 2
          %s616 = smul.u32 128, %s615
          %p617 = scmp.ne.s32.totalorder 0, %s616
          %s618 = smul.addr %s612, 8
          %s619 = scalar_lea.vmem %s7, %s618
          // Predicated region
          $region53: #{tpu_custom_call.1} parent=51 // pred_check
            %p620 = pneg %p617
          $region54: #{tpu_custom_call.1} parent=51 // pred_check_branch
            %622 = sbr.rel (%p620) target = $region56
          $region55: #{tpu_custom_call.1} parent=51 // pred_region
            // Predicated region
            $region57: #{tpu_custom_call.1} parent=55 // pred_check
              _
            $region58: #{tpu_custom_call.1} parent=55 // pred_check_branch
              %624 = sbr.rel (0) target = $region60
            $region59: #{tpu_custom_call.1} parent=55 // pred_region
              // Predicated region
              $region79: #{tpu_custom_call.1} parent=59 // pred_check
                _
              $region80: #{tpu_custom_call.1} parent=59 // pred_check_branch
                %675 = sbr.rel (0) target = $region82
              $region81: #{tpu_custom_call.1} parent=59 // pred_region
                %s676 = sshrl.u32 %s615, 1
                // While loop
                $region83: #{tpu_custom_call.1} parent=81 // loop_pre_header
                  _
                $region84: #{tpu_custom_call.1} parent=81 // loop_header
                  %s678 = sphi 0, %s680
                  %p679 = scmp.ge.s32.totalorder %s678, %s676
                  %s683 = sphi 0, %s692
                  %s684 = sphi %s608, %s695
                  %s685 = sphi %s619, %s696
                $region85: #{tpu_custom_call.1} parent=81 // loop_header_branch
                  %682 = sbr.rel (%p679) target = $region89
                $region86: #{tpu_custom_call.1} parent=81 // loop_body
                  %v686 = vld [vmem:[%s684] sm:$0xff]
                  %687 = vst [vmem:[%s685] sm:$0xff] %v686
                  %v688 = vld [vmem:[%s684 + $0x8] sm:$0xff]
                  %689 = vst [vmem:[%s685 + $0x8] sm:$0xff] %v688
                  %s690 = sadd.s32 1, %s683
                  %p691 = scmp.ge.s32.totalorder %s690, %s676
                  %s692 = scalar_select %p691, 0, %s690
                  %s693 = smul.u32 %s692, 16
                  %s694 = smul.u32 %s692, 16
                  %s695 = scalar_lea.vmem %s608, %s693 [#allocation2]
                  %s696 = scalar_lea.vmem %s619, %s694
                $region87: #{tpu_custom_call.1} parent=81 // loop_footer
                  %s680 = sadd.s32 %s678, 1
                $region88: #{tpu_custom_call.1} parent=81 // loop_footer_branch
                  %677 = sbr.rel target = $region84
                $region89: #{tpu_custom_call.1} parent=81 // loop_exit
                  _
                %s697 = sshrl.u32 %s615, 1
                %s698 = sand.u32 %s615, 1
                %s699 = smul.u32 %s697, 2
                %s700 = smul.u32 8, %s699
                %s701 = scalar_lea.vmem %s608, %s700 [#allocation2]
                %s702 = smul.u32 8, %s699
                %s703 = scalar_lea.vmem %s619, %s702
                // While loop
                $region90: #{tpu_custom_call.1} parent=81 // loop_pre_header
                  _
                $region91: #{tpu_custom_call.1} parent=81 // loop_header
                  %s705 = sphi 0, %s707
                  %p706 = scmp.ge.s32.totalorder %s705, %s698
                  %s710 = sphi 0, %s717
                  %s711 = sphi %s701, %s720
                  %s712 = sphi %s703, %s721
                $region92: #{tpu_custom_call.1} parent=81 // loop_header_branch
                  %709 = sbr.rel (%p706) target = $region96
                $region93: #{tpu_custom_call.1} parent=81 // loop_body
                  %v713 = vld [vmem:[%s711] sm:$0xff]
                  %714 = vst [vmem:[%s712] sm:$0xff] %v713
                  %s715 = sadd.s32 1, %s710
                  %p716 = scmp.ge.s32.totalorder %s715, %s698
                  %s717 = scalar_select %p716, 0, %s715
                  %s718 = smul.u32 %s717, 8
                  %s719 = smul.u32 %s717, 8
                  %s720 = scalar_lea.vmem %s701, %s718 [#allocation2]
                  %s721 = scalar_lea.vmem %s703, %s719
                $region94: #{tpu_custom_call.1} parent=81 // loop_footer
                  %s707 = sadd.s32 %s705, 1
                $region95: #{tpu_custom_call.1} parent=81 // loop_footer_branch
                  %704 = sbr.rel target = $region91
                $region96: #{tpu_custom_call.1} parent=81 // loop_exit
                  _
              $region82: #{tpu_custom_call.1} parent=59 // pred_fallthru
                _
              // Predicated region
              $region97: #{tpu_custom_call.1} parent=59 // pred_check
                _
              $region98: #{tpu_custom_call.1} parent=59 // pred_check_branch
                %723 = sbr.rel target = $region100
              $region99: #{tpu_custom_call.1} parent=59 // pred_region
                _
              $region100: #{tpu_custom_call.1} parent=59 // pred_fallthru
                _
            $region60: #{tpu_custom_call.1} parent=55 // pred_fallthru
              _
            // Predicated region
            $region61: #{tpu_custom_call.1} parent=55 // pred_check
              _
            $region62: #{tpu_custom_call.1} parent=55 // pred_check_branch
              %626 = sbr.rel target = $region64
            $region63: #{tpu_custom_call.1} parent=55 // pred_region
              %s628 = sshrl.u32 %s615, 1
              // While loop
              $region65: #{tpu_custom_call.1} parent=63 // loop_pre_header
                _
              $region66: #{tpu_custom_call.1} parent=63 // loop_header
                %s630 = sphi 0, %s632
                %p631 = scmp.ge.s32.totalorder %s630, %s628
                %s635 = sphi 0, %s644
                %s636 = sphi %s608, %s647
                %s637 = sphi %s619, %s648
              $region67: #{tpu_custom_call.1} parent=63 // loop_header_branch
                %634 = sbr.rel (%p631) target = $region71
              $region68: #{tpu_custom_call.1} parent=63 // loop_body
                %v638 = vld [vmem:[%s636] sm:$0xff]
                %639 = vst [vmem:[%s637] sm:$0xff] %v638
                %v640 = vld [vmem:[%s636 + $0x8] sm:$0xff]
                %641 = vst [vmem:[%s637 + $0x8] sm:$0xff] %v640
                %s642 = sadd.s32 1, %s635
                %p643 = scmp.ge.s32.totalorder %s642, %s628
                %s644 = scalar_select %p643, 0, %s642
                %s645 = smul.u32 %s644, 16
                %s646 = smul.u32 %s644, 16
                %s647 = scalar_lea.vmem %s608, %s645 [#allocation2]
                %s648 = scalar_lea.vmem %s619, %s646
              $region69: #{tpu_custom_call.1} parent=63 // loop_footer
                %s632 = sadd.s32 %s630, 1
              $region70: #{tpu_custom_call.1} parent=63 // loop_footer_branch
                %629 = sbr.rel target = $region66
              $region71: #{tpu_custom_call.1} parent=63 // loop_exit
                _
              %s649 = sshrl.u32 %s615, 1
              %s650 = sand.u32 %s615, 1
              %s651 = smul.u32 %s649, 2
              %s652 = smul.u32 8, %s651
              %s653 = scalar_lea.vmem %s608, %s652 [#allocation2]
              %s654 = smul.u32 8, %s651
              %s655 = scalar_lea.vmem %s619, %s654
              // While loop
              $region72: #{tpu_custom_call.1} parent=63 // loop_pre_header
                _
              $region73: #{tpu_custom_call.1} parent=63 // loop_header
                %s657 = sphi 0, %s659
                %p658 = scmp.ge.s32.totalorder %s657, %s650
                %s662 = sphi 0, %s669
                %s663 = sphi %s653, %s672
                %s664 = sphi %s655, %s673
              $region74: #{tpu_custom_call.1} parent=63 // loop_header_branch
                %661 = sbr.rel (%p658) target = $region78
              $region75: #{tpu_custom_call.1} parent=63 // loop_body
                %v665 = vld [vmem:[%s663] sm:$0xff]
                %666 = vst [vmem:[%s664] sm:$0xff] %v665
                %s667 = sadd.s32 1, %s662
                %p668 = scmp.ge.s32.totalorder %s667, %s650
                %s669 = scalar_select %p668, 0, %s667
                %s670 = smul.u32 %s669, 8
                %s671 = smul.u32 %s669, 8
                %s672 = scalar_lea.vmem %s653, %s670 [#allocation2]
                %s673 = scalar_lea.vmem %s655, %s671
              $region76: #{tpu_custom_call.1} parent=63 // loop_footer
                %s659 = sadd.s32 %s657, 1
              $region77: #{tpu_custom_call.1} parent=63 // loop_footer_branch
                %656 = sbr.rel target = $region73
              $region78: #{tpu_custom_call.1} parent=63 // loop_exit
                _
            $region64: #{tpu_custom_call.1} parent=55 // pred_fallthru
              _
          $region56: #{tpu_custom_call.1} parent=51 // pred_fallthru
            _
          %724 = vnop
        $region52: #{tpu_custom_call.1} parent=47 // pred_fallthru
          _
      $region48: #{tpu_custom_call.1} parent=5 // pred_fallthru
        _
      %p725 = scmp.le.s32.totalorder 2, %s13
      // Predicated region
      $region101: #{tpu_custom_call.1} parent=5 // pred_check
        %p726 = pneg %p725
      $region102: #{tpu_custom_call.1} parent=5 // pred_check_branch
        %728 = sbr.rel (%p726) target = $region104
      $region103: #{tpu_custom_call.1} parent=5 // pred_region
        %s729 = ssub.s32 %s13, 2
        // Predicated region
        $region105: #{tpu_custom_call.1} parent=103 // pred_check
          %p730 = pneg %p194
        $region106: #{tpu_custom_call.1} parent=103 // pred_check_branch
          %732 = sbr.rel (%p730) target = $region108
        $region107: #{tpu_custom_call.1} parent=103 // pred_region
          %s733 = sand.u32 %s179, 1
          %s734 = sand.u32 %s179, 1
          %s735 = smul.addr %s734, 16
          %s736 = scalar_lea.vmem [#allocation2], %s735
        $region108: #{tpu_custom_call.1} parent=103 // pred_fallthru
          _
      $region104: #{tpu_custom_call.1} parent=5 // pred_fallthru
        _
    $region6: #{tpu_custom_call.1} parent=1 // loop_footer
      %s17 = sadd.s32 1, %s13
    $region7: #{tpu_custom_call.1} parent=1 // loop_footer_branch
      %12 = sbr.rel target = $region3
    $region8: #{tpu_custom_call.1} parent=1 // loop_exit
      _

// kernel: tpu_custom_call.1
$region0: #{tpu_custom_call.1}
  #allocation0 [shape = 'u32[]', space=smem, size = 0x4, offset = 0x4, fixed_abs, tag = 'smem constant byte address 0x4 - core index']
  #allocation1 [shape = 'u32[144,128]{1,0:T(1,128)}', space=vmem, size = 0x12000, scoped, tag = 'internal scratch']
  %s0 = inlined_call_operand.vmem [shape: f32[100,32], index: 0, kind: input, shape index: {}]
  %s1 = inlined_call_operand.vmem [shape: bf16[32,128], index: 1, kind: input, shape index: {}]
  %s2 = inlined_call_operand.vmem [shape: f32[1,128], index: 2, kind: input, shape index: {}]
  %s3 = inlined_call_operand.vmem [shape: bf16[128,128], index: 3, kind: input, shape index: {}]
  %s4 = inlined_call_operand.vmem [shape: f32[1,128], index: 4, kind: input, shape index: {}]
  %s5 = inlined_call_operand.vmem [shape: bf16[128,8], index: 5, kind: input, shape index: {}]
  %s6 = inlined_call_operand.vmem [shape: f32[1,8], index: 6, kind: input, shape index: {}]
  %s7 = inlined_call_operand.vmem [shape: f32[100,8], index: 7, kind: output, shape index: {}]
  %s8 = sld [smem:[#allocation0]]
  $region109: #{tpu_custom_call.1} parent=0
    _
  %s10 = ssub.s32 1, %s8
  %s11 = scalar_select 0, %s10, %s8
  $region1: #{tpu_custom_call.1} parent=0
    #allocation2 [shape = 'u8[16384]{0}', space=vmem, size = 0x4000, scoped, tag = 'output window, operand 0']
    loop: start=0, step=1, limit=9
    $region2: #{tpu_custom_call.1} parent=1 // loop_pre_header
      _
    $region3: #{tpu_custom_call.1} parent=1 // loop_header
      %s13 = sphi 0, %s17
      %p14 = scmp.ge.s32.totalorder %s13, 9
      %s23 = sphi 0, %s25
      %s26 = sphi 0, %s23
      %s27 = sphi 0, %s26
      %s43 = sphi 0, %s27
      %s47 = sphi 0, %s47
      %s49 = sphi 0, %s47
      %s50 = sphi 0, %s49
      %s64 = sphi 0, %s50
      %s68 = sphi 0, %s68
      %s70 = sphi 0, %s68
      %s71 = sphi 0, %s70
      %s85 = sphi 0, %s71
      %s89 = sphi 0, %s89
      %s91 = sphi 0, %s89
      %s92 = sphi 0, %s91
      %s106 = sphi 0, %s92
      %s110 = sphi 0, %s110
      %s112 = sphi 0, %s110
      %s113 = sphi 0, %s112
      %s127 = sphi 0, %s113
      %s131 = sphi 0, %s131
      %s133 = sphi 0, %s131
      %s134 = sphi 0, %s133
      %s148 = sphi 0, %s134
      %s152 = sphi 0, %s152
      %s154 = sphi 0, %s152
      %s155 = sphi 0, %s154
      %s169 = sphi 0, %s155
      %s175 = sphi 0, %s177
      %s178 = sphi 0, %s175
      %s179 = sphi 0, %s178
      %s195 = sphi 0, %s179
    $region4: #{tpu_custom_call.1} parent=1 // loop_header_branch
      %16 = sbr.rel (%p14) target = $region8
    $region5: #{tpu_custom_call.1} parent=1 // loop_body
      %s18 = ssub.s32 %s13, 1
      %s19 = ssub.s32 %s13, 2
      %s20 = sadd.s32 %s13, 1
      %s21 = ssub.s32 %s13, %s20
      %p22 = scmp.eq.s32.totalorder %s21, 0
      %s24 = sadd.s32 %s23, 1
      %s25 = scalar_select %p22, %s23, %s24
      %p28 = pneg %p22
      %p29 = scmp.eq.s32.totalorder %s13, 6
      %p30 = por %p28, %p29
      %p31 = scmp.ne.s32.totalorder %s23, %s26
      %p32 = scmp.eq.s32.totalorder %s13, 0
      %p33 = por %p31, %p32
      %p34 = scmp.ne.s32.totalorder %s23, %s26
      %p35 = scmp.eq.s32.totalorder %s18, 6
      %p36 = por %p34, %p35
      %p37 = scmp.ne.s32.totalorder %s26, %s27
      %p38 = scmp.eq.s32.totalorder %s18, 0
      %p39 = por %p37, %p38
      %p40 = scmp.ne.s32.totalorder %s26, %s27
      %p41 = scmp.eq.s32.totalorder %s19, 6
      %p42 = por %p40, %p41
      %p44 = scmp.ne.s32.totalorder %s27, %s43
      %p45 = scmp.eq.s32.totalorder %s19, 0
      %p46 = por %p44, %p45
      %s48 = sadd.s32 %s47, 1
      %p51 = scmp.eq.s32.totalorder %s13, 6
      %p52 = scmp.ne.s32.totalorder %s47, %s49
      %p53 = scmp.eq.s32.totalorder %s13, 0
      %p54 = por %p52, %p53
      %p55 = scmp.ne.s32.totalorder %s47, %s49
      %p56 = scmp.eq.s32.totalorder %s18, 6
      %p57 = por %p55, %p56
      %p58 = scmp.ne.s32.totalorder %s49, %s50
      %p59 = scmp.eq.s32.totalorder %s18, 0
      %p60 = por %p58, %p59
      %p61 = scmp.ne.s32.totalorder %s49, %s50
      %p62 = scmp.eq.s32.totalorder %s19, 6
      %p63 = por %p61, %p62
      %p65 = scmp.ne.s32.totalorder %s50, %s64
      %p66 = scmp.eq.s32.totalorder %s19, 0
      %p67 = por %p65, %p66
      %s69 = sadd.s32 %s68, 1
      %p72 = scmp.eq.s32.totalorder %s13, 6
      %p73 = scmp.ne.s32.totalorder %s68, %s70
      %p74 = scmp.eq.s32.totalorder %s13, 0
      %p75 = por %p73, %p74
      %p76 = scmp.ne.s32.totalorder %s68, %s70
      %p77 = scmp.eq.s32.totalorder %s18, 6
      %p78 = por %p76, %p77
      %p79 = scmp.ne.s32.totalorder %s70, %s71
      %p80 = scmp.eq.s32.totalorder %s18, 0
      %p81 = por %p79, %p80
      %p82 = scmp.ne.s32.totalorder %s70, %s71
      %p83 = scmp.eq.s32.totalorder %s19, 6
      %p84 = por %p82, %p83
      %p86 = scmp.ne.s32.totalorder %s71, %s85
      %p87 = scmp.eq.s32.totalorder %s19, 0
      %p88 = por %p86, %p87
      %s90 = sadd.s32 %s89, 1
      %p93 = scmp.eq.s32.totalorder %s13, 6
      %p94 = scmp.ne.s32.totalorder %s89, %s91
      %p95 = scmp.eq.s32.totalorder %s13, 0
      %p96 = por %p94, %p95
      %p97 = scmp.ne.s32.totalorder %s89, %s91
      %p98 = scmp.eq.s32.totalorder %s18, 6
      %p99 = por %p97, %p98
      %p100 = scmp.ne.s32.totalorder %s91, %s92
      %p101 = scmp.eq.s32.totalorder %s18, 0
      %p102 = por %p100, %p101
      %p103 = scmp.ne.s32.totalorder %s91, %s92
      %p104 = scmp.eq.s32.totalorder %s19, 6
      %p105 = por %p103, %p104
      %p107 = scmp.ne.s32.totalorder %s92, %s106
      %p108 = scmp.eq.s32.totalorder %s19, 0
      %p109 = por %p107, %p108
      %s111 = sadd.s32 %s110, 1
      %p114 = scmp.eq.s32.totalorder %s13, 6
      %p115 = scmp.ne.s32.totalorder %s110, %s112
      %p116 = scmp.eq.s32.totalorder %s13, 0
      %p117 = por %p115, %p116
      %p118 = scmp.ne.s32.totalorder %s110, %s112
      %p119 = scmp.eq.s32.totalorder %s18, 6
      %p120 = por %p118, %p119
      %p121 = scmp.ne.s32.totalorder %s112, %s113
      %p122 = scmp.eq.s32.totalorder %s18, 0
      %p123 = por %p121, %p122
      %p124 = scmp.ne.s32.totalorder %s112, %s113
      %p125 = scmp.eq.s32.totalorder %s19, 6
      %p126 = por %p124, %p125
      %p128 = scmp.ne.s32.totalorder %s113, %s127
      %p129 = scmp.eq.s32.totalorder %s19, 0
      %p130 = por %p128, %p129
      %s132 = sadd.s32 %s131, 1
      %p135 = scmp.eq.s32.totalorder %s13, 6
      %p136 = scmp.ne.s32.totalorder %s131, %s133
      %p137 = scmp.eq.s32.totalorder %s13, 0
      %p138 = por %p136, %p137
      %p139 = scmp.ne.s32.totalorder %s131, %s133
      %p140 = scmp.eq.s32.totalorder %s18, 6
      %p141 = por %p139, %p140
      %p142 = scmp.ne.s32.totalorder %s133, %s134
      %p143 = scmp.eq.s32.totalorder %s18, 0
      %p144 = por %p142, %p143
      %p145 = scmp.ne.s32.totalorder %s133, %s134
      %p146 = scmp.eq.s32.totalorder %s19, 6
      %p147 = por %p145, %p146
      %p149 = scmp.ne.s32.totalorder %s134, %s148
      %p150 = scmp.eq.s32.totalorder %s19, 0
      %p151 = por %p149, %p150
      %s153 = sadd.s32 %s152, 1
      %p156 = scmp.eq.s32.totalorder %s13, 6
      %p157 = scmp.ne.s32.totalorder %s152, %s154
      %p158 = scmp.eq.s32.totalorder %s13, 0
      %p159 = por %p157, %p158
      %p160 = scmp.ne.s32.totalorder %s152, %s154
      %p161 = scmp.eq.s32.totalorder %s18, 6
      %p162 = por %p160, %p161
      %p163 = scmp.ne.s32.totalorder %s154, %s155
      %p164 = scmp.eq.s32.totalorder %s18, 0
      %p165 = por %p163, %p164
      %p166 = scmp.ne.s32.totalorder %s154, %s155
      %p167 = scmp.eq.s32.totalorder %s19, 6
      %p168 = por %p166, %p167
      %p170 = scmp.ne.s32.totalorder %s155, %s169
      %p171 = scmp.eq.s32.totalorder %s19, 0
      %p172 = por %p170, %p171
      %s173 = ssub.s32 %s13, %s20
      %p174 = scmp.eq.s32.totalorder %s173, 0
      %s176 = sadd.s32 %s175, 1
      %s177 = scalar_select %p174, %s175, %s176
      %p180 = pneg %p174
      %p181 = scmp.eq.s32.totalorder %s13, 6
      %p182 = por %p180, %p181
      %p183 = scmp.ne.s32.totalorder %s175, %s178
      %p184 = scmp.eq.s32.totalorder %s13, 0
      %p185 = por %p183, %p184
      %p186 = scmp.ne.s32.totalorder %s175, %s178
      %p187 = scmp.eq.s32.totalorder %s18, 6
      %p188 = por %p186, %p187
      %p189 = scmp.ne.s32.totalorder %s178, %s179
      %p190 = scmp.eq.s32.totalorder %s18, 0
      %p191 = por %p189, %p190
      %p192 = scmp.ne.s32.totalorder %s178, %s179
      %p193 = scmp.eq.s32.totalorder %s19, 6
      %p194 = por %p192, %p193
      %p196 = scmp.ne.s32.totalorder %s179, %s195
      %p197 = scmp.eq.s32.totalorder %s19, 0
      %p198 = por %p196, %p197
      %p199 = scmp.le.s32.totalorder 1, %s13
      %p200 = scmp.lt.s32.totalorder %s13, 8
      %p201 = pnand %p199, %p200
      %p202 = pneg %p201
      // Predicated region
      $region9: #{tpu_custom_call.1} parent=5 // pred_check
        _
      $region10: #{tpu_custom_call.1} parent=5 // pred_check_branch
        %204 = sbr.rel (%p201) target = $region12
      $region11: #{tpu_custom_call.1} parent=5 // pred_region
        %s205 = ssub.s32 %s13, 1
        // Predicated region
        $region13: #{tpu_custom_call.1} parent=11 // pred_check
          %p206 = pneg %p60
        $region14: #{tpu_custom_call.1} parent=11 // pred_check_branch
          %208 = sbr.rel (%p206) target = $region16
        $region15: #{tpu_custom_call.1} parent=11 // pred_region
          _
        $region16: #{tpu_custom_call.1} parent=11 // pred_fallthru
          _
        // Predicated region
        $region17: #{tpu_custom_call.1} parent=11 // pred_check
          %p209 = pneg %p81
        $region18: #{tpu_custom_call.1} parent=11 // pred_check_branch
          %211 = sbr.rel (%p209) target = $region20
        $region19: #{tpu_custom_call.1} parent=11 // pred_region
          _
        $region20: #{tpu_custom_call.1} parent=11 // pred_fallthru
          _
        // Predicated region
        $region21: #{tpu_custom_call.1} parent=11 // pred_check
          %p212 = pneg %p102
        $region22: #{tpu_custom_call.1} parent=11 // pred_check_branch
          %214 = sbr.rel (%p212) target = $region24
        $region23: #{tpu_custom_call.1} parent=11 // pred_region
          _
        $region24: #{tpu_custom_call.1} parent=11 // pred_fallthru
          _
        // Predicated region
        $region25: #{tpu_custom_call.1} parent=11 // pred_check
          %p215 = pneg %p123
        $region26: #{tpu_custom_call.1} parent=11 // pred_check_branch
          %217 = sbr.rel (%p215) target = $region28
        $region27: #{tpu_custom_call.1} parent=11 // pred_region
          _
        $region28: #{tpu_custom_call.1} parent=11 // pred_fallthru
          _
        // Predicated region
        $region29: #{tpu_custom_call.1} parent=11 // pred_check
          %p218 = pneg %p144
        $region30: #{tpu_custom_call.1} parent=11 // pred_check_branch
          %220 = sbr.rel (%p218) target = $region32
        $region31: #{tpu_custom_call.1} parent=11 // pred_region
          _
        $region32: #{tpu_custom_call.1} parent=11 // pred_fallthru
          _
        // Predicated region
        $region33: #{tpu_custom_call.1} parent=11 // pred_check
          %p221 = pneg %p165
        $region34: #{tpu_custom_call.1} parent=11 // pred_check_branch
          %223 = sbr.rel (%p221) target = $region36
        $region35: #{tpu_custom_call.1} parent=11 // pred_region
          _
        $region36: #{tpu_custom_call.1} parent=11 // pred_fallthru
          _
      $region12: #{tpu_custom_call.1} parent=5 // pred_fallthru
        _
      %p224 = scmp.lt.s32.totalorder %s13, 7
      // Predicated region
      $region37: #{tpu_custom_call.1} parent=5 // pred_check
        %p225 = pneg %p224
      $region38: #{tpu_custom_call.1} parent=5 // pred_check_branch
        %227 = sbr.rel (%p225) target = $region40
      $region39: #{tpu_custom_call.1} parent=5 // pred_region
        // Predicated region
        $region41: #{tpu_custom_call.1} parent=39 // pred_check
          %p228 = pneg %p33
        $region42: #{tpu_custom_call.1} parent=39 // pred_check_branch
          %230 = sbr.rel (%p228) target = $region44
        $region43: #{tpu_custom_call.1} parent=39 // pred_region
          %s231 = smul.u32 2, %s13
          %s232 = ssub.s32 13, %s231
          %p233 = scmp.lt.s32.totalorder %s232, 2
          %s234 = scalar_select %p233, %s232, 2
          %s235 = smul.u32 128, %s234
          %p236 = scmp.lt.s32.totalorder %s231, 12
          %s237 = scalar_select %p236, %s231, 12
          %s238 = smul.addr %s237, 8
          %s239 = scalar_lea.vmem %s0, %s238
          %s240 = smul.u32 2, %s13
          %s241 = ssub.s32 13, %s240
          %p242 = scmp.lt.s32.totalorder %s241, 2
          %s243 = scalar_select %p242, %s241, 2
          %s244 = smul.u32 128, %s243
        $region44: #{tpu_custom_call.1} parent=39 // pred_fallthru
          _
      $region40: #{tpu_custom_call.1} parent=5 // pred_fallthru
        _
      %p245 = scmp.le.s32.totalorder 1, %s13
      %p246 = scmp.lt.s32.totalorder %s13, 8
      %p247 = pnand %p245, %p246
      %p248 = pneg %p247
      // Predicated region
      $region45: #{tpu_custom_call.1} parent=5 // pred_check
        _
      $region46: #{tpu_custom_call.1} parent=5 // pred_check_branch
        %250 = sbr.rel (%p247) target = $region48
      $region47: #{tpu_custom_call.1} parent=5 // pred_region
        %s251 = ssub.s32 %s13, 1
        %s252 = smul.u32 2, %s18
        %s253 = ssub.s32 13, %s252
        %p254 = scmp.lt.s32.totalorder %s253, 2
        %s255 = scalar_select %p254, %s253, 2
        %s256 = smul.u32 128, %s255
        %p257 = scmp.lt.s32.totalorder %s252, 12
        %s258 = scalar_select %p257, %s252, 12
        %s259 = smul.addr %s258, 8
        %s260 = scalar_lea.vmem %s0, %s259
        %p261 = pneg %p39
        %p262 = pneg %p36
        %p263 = pneg %p60
        %p264 = pneg %p57
        %p265 = pneg %p81
        %p266 = pneg %p78
        %p267 = pneg %p102
        %p268 = pneg %p99
        %p269 = pneg %p123
        %p270 = pneg %p120
        %p271 = pneg %p144
        %p272 = pneg %p141
        %p273 = pneg %p165
        %p274 = pneg %p162
        %p275 = pneg %p191
        %p276 = pneg %p188
        %s277 = sand.u32 %s178, 1
        %s278 = sand.u32 %s178, 1
        %s279 = smul.addr %s278, 16
        %s280 = scalar_lea.vmem [#allocation2], %s279
        %s281 = smul.u32 2, %s18
        %s282 = ssub.s32 13, %s281
        %p283 = scmp.lt.s32.totalorder %s282, 2
        %s284 = scalar_select %p283, %s282, 2
        %s285 = smul.u32 128, %s284
        %p286 = scmp.lt.s32.totalorder %s281, 12
        %s287 = scalar_select %p286, %s281, 12
        %s288 = smul.addr %s287, 8
        %s289 = scalar_lea.vmem %s0, %s288
        %s290 = smul.u32 2, %s18
        %s291 = ssub.s32 13, %s290
        %p292 = scmp.lt.s32.totalorder %s291, 2
        %s293 = scalar_select %p292, %s291, 2
        %s294 = smul.u32 128, %s293
        %s295 = smul.u32 2, %s18
        %s296 = ssub.s32 13, %s295
        %p297 = scmp.lt.s32.totalorder %s296, 2
        %s298 = scalar_select %p297, %s296, 2
        %s299 = smul.u32 128, %s298
        %v301 = vld [vmem:[%s289] sm:$0xff]
        %v302 = vld [vmem:[%s289 + $0x8] sm:$0xff]
        %v303 = vpack.c.bf16 %v302, %v301
        %v304 = vld [vmem:[%s1] sm:$0xf]
        %v305 = vld [vmem:[%s1 + $0x4] sm:$0xf]
        %v306 = vld [vmem:[%s1 + $0x8] sm:$0xf]
        %v307 = vld [vmem:[%s1 + $0xc] sm:$0xf]
        %v308 = vld [vmem:[%s2] sm:$0x1]
        %v310 = vlaneseq
        %v311 = vshrl.u32 %v310, 7
        %v312 = vsub.s32 0, %v311
        %v313 = vrot.slane %v308, %v312
        %v319 = vunpack.c.l.b16 %v304
        %v320 = vunpack.c.l.b16 %v305
        %v321 = vunpack.c.l.b16 %v306
        %v322 = vunpack.c.l.b16 %v307
        %v323 = vpack.c.b16 %v320, %v319
        %v324 = vpack.c.b16 %v322, %v321
        %vm327 = vcmask 261120
        %v329 = vsel %vm327, %v303, 0
        %331 = vmatprep.subr.bf16.mxu0 0
        %332 = vmatpush1.bf16.msra.mxu0 %v323
        %333 = vmatprep.subr.bf16.mxu0 0
        %334 = vmatpush1.bf16.msra.mxu0 %v324
        %335 = vmatprep.subr.bf16.mxu0 0
        %336 = vmatpush1.bf16.msra.mxu0 0
        %337 = vmatprep.subr.bf16.mxu0 0
        %338 = vmatpush1.bf16.msra.mxu0 0
        %339 = vmatprep.subr.bf16.mxu0 0
        %340 = vmatpush1.bf16.msra.mxu0 0
        %341 = vmatprep.subr.bf16.mxu0 0
        %342 = vmatpush1.bf16.msra.mxu0 0
        %343 = vmatprep.subr.bf16.mxu0 0
        %344 = vmatpush1.bf16.msra.mxu0 0
        %345 = vmatprep.subr.bf16.mxu0 0
        %346 = vmatpush1.bf16.msra.mxu0 0
        %347 = vmatprep.subr.bf16.mxu0 0
        %348 = vmatpush1.bf16.msra.mxu0 0
        %349 = vmatprep.subr.bf16.mxu0 0
        %350 = vmatpush1.bf16.msra.mxu0 0
        %351 = vmatprep.subr.bf16.mxu0 0
        %352 = vmatpush1.bf16.msra.mxu0 0
        %353 = vmatprep.subr.bf16.mxu0 0
        %354 = vmatpush1.bf16.msra.mxu0 0
        %355 = vmatprep.subr.bf16.mxu0 0
        %356 = vmatpush1.bf16.msra.mxu0 0
        %357 = vmatprep.subr.bf16.mxu0 0
        %358 = vmatpush1.bf16.msra.mxu0 0
        %359 = vmatprep.subr.bf16.mxu0 0
        %360 = vmatpush1.bf16.msra.mxu0 0
        %361 = vmatprep.subr.bf16.mxu0 0
        %362 = vmatpush1.bf16.msra.mxu0 0
        %363 = vmatprep.mubr.bf16.mxu0 0
        %364 = vmatmul.mubr.bf16.gmra.mrb[0].mxu0 %v329
        %v365 = vpop.f32.mrb[0].mxu0
        %v366 = vadd.f32 %v313, %v365
        %v367 = vpop.f32.mrb[0].mxu0
        %v368 = vpop.f32.mrb[0].mxu0
        %v369 = vadd.f32 %v313, %v368
        %v370 = vpop.f32.mrb[0].mxu0
        %371 = vdwg.mxu0
        %v372 = vmax.f32 %v366, 0.0
        %v373 = vmax.f32 %v369, 0.0
        %v374 = vpack.c.bf16 %v373, %v372
        %v375 = vld [vmem:[%s3] sm:$0xf]
        %v376 = vld [vmem:[%s3 + $0x4] sm:$0xf]
        %v377 = vld [vmem:[%s3 + $0x8] sm:$0xf]
        %v378 = vld [vmem:[%s3 + $0xc] sm:$0xf]
        %v379 = vld [vmem:[%s3 + $0x10] sm:$0xf]
        %v380 = vld [vmem:[%s3 + $0x14] sm:$0xf]
        %v381 = vld [vmem:[%s3 + $0x18] sm:$0xf]
        %v382 = vld [vmem:[%s3 + $0x1c] sm:$0xf]
        %v383 = vld [vmem:[%s3 + $0x20] sm:$0xf]
        %v384 = vld [vmem:[%s3 + $0x24] sm:$0xf]
        %v385 = vld [vmem:[%s3 + $0x28] sm:$0xf]
        %v386 = vld [vmem:[%s3 + $0x2c] sm:$0xf]
        %v387 = vld [vmem:[%s3 + $0x30] sm:$0xf]
        %v388 = vld [vmem:[%s3 + $0x34] sm:$0xf]
        %v389 = vld [vmem:[%s3 + $0x38] sm:$0xf]
        %v390 = vld [vmem:[%s3 + $0x3c] sm:$0xf]
        %v391 = vld [vmem:[%s4] sm:$0x1]
        %v393 = vlaneseq
        %v394 = vshrl.u32 %v393, 7
        %v395 = vsub.s32 0, %v394
        %v396 = vrot.slane %v391, %v395
        %v414 = vunpack.c.l.b16 %v375
        %v415 = vunpack.c.l.b16 %v376
        %v416 = vunpack.c.l.b16 %v377
        %v417 = vunpack.c.l.b16 %v378
        %v418 = vunpack.c.l.b16 %v379
        %v419 = vunpack.c.l.b16 %v380
        %v420 = vunpack.c.l.b16 %v381
        %v421 = vunpack.c.l.b16 %v382
        %v422 = vunpack.c.l.b16 %v383
        %v423 = vunpack.c.l.b16 %v384
        %v424 = vunpack.c.l.b16 %v385
        %v425 = vunpack.c.l.b16 %v386
        %v426 = vunpack.c.l.b16 %v387
        %v427 = vunpack.c.l.b16 %v388
        %v428 = vunpack.c.l.b16 %v389
        %v429 = vunpack.c.l.b16 %v390
        %v430 = vpack.c.b16 %v415, %v414
        %v431 = vpack.c.b16 %v417, %v416
        %v432 = vpack.c.b16 %v419, %v418
        %v433 = vpack.c.b16 %v421, %v420
        %v434 = vpack.c.b16 %v423, %v422
        %v435 = vpack.c.b16 %v425, %v424
        %v436 = vpack.c.b16 %v427, %v426
        %v437 = vpack.c.b16 %v429, %v428
        %446 = vmatprep.subr.bf16.mxu0 0
        %447 = vmatpush1.bf16.msra.mxu0 %v430
        %448 = vmatprep.subr.bf16.mxu0 0
        %449 = vmatpush1.bf16.msra.mxu0 %v431
        %450 = vmatprep.subr.bf16.mxu0 0
        %451 = vmatpush1.bf16.msra.mxu0 %v432
        %452 = vmatprep.subr.bf16.mxu0 0
        %453 = vmatpush1.bf16.msra.mxu0 %v433
        %454 = vmatprep.subr.bf16.mxu0 0
        %455 = vmatpush1.bf16.msra.mxu0 %v434
        %456 = vmatprep.subr.bf16.mxu0 0
        %457 = vmatpush1.bf16.msra.mxu0 %v435
        %458 = vmatprep.subr.bf16.mxu0 0
        %459 = vmatpush1.bf16.msra.mxu0 %v436
        %460 = vmatprep.subr.bf16.mxu0 0
        %461 = vmatpush1.bf16.msra.mxu0 %v437
        %462 = vmatprep.subr.bf16.mxu0 0
        %463 = vmatpush1.bf16.msra.mxu0 0
        %464 = vmatprep.subr.bf16.mxu0 0
        %465 = vmatpush1.bf16.msra.mxu0 0
        %466 = vmatprep.subr.bf16.mxu0 0
        %467 = vmatpush1.bf16.msra.mxu0 0
        %468 = vmatprep.subr.bf16.mxu0 0
        %469 = vmatpush1.bf16.msra.mxu0 0
        %470 = vmatprep.subr.bf16.mxu0 0
        %471 = vmatpush1.bf16.msra.mxu0 0
        %472 = vmatprep.subr.bf16.mxu0 0
        %473 = vmatpush1.bf16.msra.mxu0 0
        %474 = vmatprep.subr.bf16.mxu0 0
        %475 = vmatpush1.bf16.msra.mxu0 0
        %476 = vmatprep.subr.bf16.mxu0 0
        %477 = vmatpush1.bf16.msra.mxu0 0
        %478 = vmatprep.mubr.bf16.mxu0 0
        %479 = vmatmul.mubr.bf16.gmra.mrb[0].mxu0 %v374
        %v480 = vpop.f32.mrb[0].mxu0
        %v481 = vadd.f32 %v396, %v480
        %v482 = vpop.f32.mrb[0].mxu0
        %v483 = vpop.f32.mrb[0].mxu0
        %v484 = vadd.f32 %v396, %v483
        %v485 = vpop.f32.mrb[0].mxu0
        %486 = vdwg.mxu0
        %v487 = vmax.f32 %v481, 0.0
        %v488 = vmax.f32 %v484, 0.0
        %v489 = vpack.c.bf16 %v488, %v487
        %v490 = vld [vmem:[%s5] sm:$0xf]
        %v491 = vld [vmem:[%s5 + $0x4] sm:$0xf]
        %v492 = vld [vmem:[%s5 + $0x8] sm:$0xf]
        %v493 = vld [vmem:[%s5 + $0xc] sm:$0xf]
        %v494 = vld [vmem:[%s5 + $0x10] sm:$0xf]
        %v495 = vld [vmem:[%s5 + $0x14] sm:$0xf]
        %v496 = vld [vmem:[%s5 + $0x18] sm:$0xf]
        %v497 = vld [vmem:[%s5 + $0x1c] sm:$0xf]
        %v498 = vld [vmem:[%s5 + $0x20] sm:$0xf]
        %v499 = vld [vmem:[%s5 + $0x24] sm:$0xf]
        %v500 = vld [vmem:[%s5 + $0x28] sm:$0xf]
        %v501 = vld [vmem:[%s5 + $0x2c] sm:$0xf]
        %v502 = vld [vmem:[%s5 + $0x30] sm:$0xf]
        %v503 = vld [vmem:[%s5 + $0x34] sm:$0xf]
        %v504 = vld [vmem:[%s5 + $0x38] sm:$0xf]
        %v505 = vld [vmem:[%s5 + $0x3c] sm:$0xf]
        %v506 = vld [vmem:[%s6] sm:$0x1]
        %v508 = vlaneseq
        %v509 = vshrl.u32 %v508, 7
        %v510 = vsub.s32 0, %v509
        %v511 = vrot.slane %v506, %v510
        %v529 = vunpack.c.l.b16 %v490
        %v530 = vunpack.c.l.b16 %v491
        %v531 = vunpack.c.l.b16 %v492
        %v532 = vunpack.c.l.b16 %v493
        %v533 = vunpack.c.l.b16 %v494
        %v534 = vunpack.c.l.b16 %v495
        %v535 = vunpack.c.l.b16 %v496
        %v536 = vunpack.c.l.b16 %v497
        %v537 = vunpack.c.l.b16 %v498
        %v538 = vunpack.c.l.b16 %v499
        %v539 = vunpack.c.l.b16 %v500
        %v540 = vunpack.c.l.b16 %v501
        %v541 = vunpack.c.l.b16 %v502
        %v542 = vunpack.c.l.b16 %v503
        %v543 = vunpack.c.l.b16 %v504
        %v544 = vunpack.c.l.b16 %v505
        %v545 = vpack.c.b16 %v530, %v529
        %v546 = vpack.c.b16 %v532, %v531
        %v547 = vpack.c.b16 %v534, %v533
        %v548 = vpack.c.b16 %v536, %v535
        %v549 = vpack.c.b16 %v538, %v537
        %v550 = vpack.c.b16 %v540, %v539
        %v551 = vpack.c.b16 %v542, %v541
        %v552 = vpack.c.b16 %v544, %v543
        %561 = vmatprep.subr.bf16.mxu0 0
        %562 = vmatpush1.bf16.msra.mxu0 %v545
        %563 = vmatprep.subr.bf16.mxu0 0
        %564 = vmatpush1.bf16.msra.mxu0 %v546
        %565 = vmatprep.subr.bf16.mxu0 0
        %566 = vmatpush1.bf16.msra.mxu0 %v547
        %567 = vmatprep.subr.bf16.mxu0 0
        %568 = vmatpush1.bf16.msra.mxu0 %v548
        %569 = vmatprep.subr.bf16.mxu0 0
        %570 = vmatpush1.bf16.msra.mxu0 %v549
        %571 = vmatprep.subr.bf16.mxu0 0
        %572 = vmatpush1.bf16.msra.mxu0 %v550
        %573 = vmatprep.subr.bf16.mxu0 0
        %574 = vmatpush1.bf16.msra.mxu0 %v551
        %575 = vmatprep.subr.bf16.mxu0 0
        %576 = vmatpush1.bf16.msra.mxu0 %v552
        %577 = vmatprep.subr.bf16.mxu0 0
        %578 = vmatpush1.bf16.msra.mxu0 0
        %579 = vmatprep.subr.bf16.mxu0 0
        %580 = vmatpush1.bf16.msra.mxu0 0
        %581 = vmatprep.subr.bf16.mxu0 0
        %582 = vmatpush1.bf16.msra.mxu0 0
        %583 = vmatprep.subr.bf16.mxu0 0
        %584 = vmatpush1.bf16.msra.mxu0 0
        %585 = vmatprep.subr.bf16.mxu0 0
        %586 = vmatpush1.bf16.msra.mxu0 0
        %587 = vmatprep.subr.bf16.mxu0 0
        %588 = vmatpush1.bf16.msra.mxu0 0
        %589 = vmatprep.subr.bf16.mxu0 0
        %590 = vmatpush1.bf16.msra.mxu0 0
        %591 = vmatprep.subr.bf16.mxu0 0
        %592 = vmatpush1.bf16.msra.mxu0 0
        %593 = vmatprep.mubr.bf16.mxu0 0
        %594 = vmatmul.mubr.bf16.gmra.mrb[0].mxu0 %v489
        %v595 = vpop.f32.mrb[0].mxu0
        %v596 = vadd.f32 %v511, %v595
        %v597 = vpop.f32.mrb[0].mxu0
        %v598 = vpop.f32.mrb[0].mxu0
        %v599 = vadd.f32 %v511, %v598
        %v600 = vpop.f32.mrb[0].mxu0
        %601 = vdwg.mxu0
        %vm602 = vcmask 64512
        %603 = vst.msk [vmem:[%s280] sm:$0xff] %vm602, %v596
        %604 = vst.msk [vmem:[%s280 + $0x8] sm:$0xff] %vm602, %v599
        %s605 = sand.u32 %s178, 1
        %s606 = sand.u32 %s178, 1
        %s607 = smul.addr %s606, 16
        %s608 = scalar_lea.vmem [#allocation2], %s607
        // Predicated region
        $region49: #{tpu_custom_call.1} parent=47 // pred_check
          %p609 = pneg %p188
        $region50: #{tpu_custom_call.1} parent=47 // pred_check_branch
          %611 = sbr.rel (%p609) target = $region52
        $region51: #{tpu_custom_call.1} parent=47 // pred_region
          %s612 = smul.u32 2, %s18
          %s613 = ssub.s32 13, %s612
          %p614 = scmp.lt.s32.totalorder %s613, 2
          %s615 = scalar_select %p614, %s613, 2
          %s616 = smul.u32 128, %s615
          %p617 = scmp.ne.s32.totalorder 0, %s616
          %s618 = smul.addr %s612, 8
          %s619 = scalar_lea.vmem %s7, %s618
          // Predicated region
          $region53: #{tpu_custom_call.1} parent=51 // pred_check
            %p620 = pneg %p617
          $region54: #{tpu_custom_call.1} parent=51 // pred_check_branch
            %622 = sbr.rel (%p620) target = $region56
          $region55: #{tpu_custom_call.1} parent=51 // pred_region
            // Predicated region
            $region57: #{tpu_custom_call.1} parent=55 // pred_check
              _
            $region58: #{tpu_custom_call.1} parent=55 // pred_check_branch
              %624 = sbr.rel (0) target = $region60
            $region59: #{tpu_custom_call.1} parent=55 // pred_region
              // Predicated region
              $region79: #{tpu_custom_call.1} parent=59 // pred_check
                _
              $region80: #{tpu_custom_call.1} parent=59 // pred_check_branch
                %675 = sbr.rel (0) target = $region82
              $region81: #{tpu_custom_call.1} parent=59 // pred_region
                %s676 = sshrl.u32 %s615, 1
                // While loop
                $region83: #{tpu_custom_call.1} parent=81 // loop_pre_header
                  _
                $region84: #{tpu_custom_call.1} parent=81 // loop_header
                  %s678 = sphi 0, %s680
                  %p679 = scmp.ge.s32.totalorder %s678, %s676
                  %s683 = sphi 0, %s692
                  %s684 = sphi %s608, %s695
                  %s685 = sphi %s619, %s696
                $region85: #{tpu_custom_call.1} parent=81 // loop_header_branch
                  %682 = sbr.rel (%p679) target = $region89
                $region86: #{tpu_custom_call.1} parent=81 // loop_body
                  %v686 = vld [vmem:[%s684] sm:$0xff]
                  %687 = vst [vmem:[%s685] sm:$0xff] %v686
                  %v688 = vld [vmem:[%s684 + $0x8] sm:$0xff]
                  %689 = vst [vmem:[%s685 + $0x8] sm:$0xff] %v688
                  %s690 = sadd.s32 1, %s683
                  %p691 = scmp.ge.s32.totalorder %s690, %s676
                  %s692 = scalar_select %p691, 0, %s690
                  %s693 = smul.u32 %s692, 16
                  %s694 = smul.u32 %s692, 16
                  %s695 = scalar_lea.vmem %s608, %s693 [#allocation2]
                  %s696 = scalar_lea.vmem %s619, %s694
                $region87: #{tpu_custom_call.1} parent=81 // loop_footer
                  %s680 = sadd.s32 %s678, 1
                $region88: #{tpu_custom_call.1} parent=81 // loop_footer_branch
                  %677 = sbr.rel target = $region84
                $region89: #{tpu_custom_call.1} parent=81 // loop_exit
                  _
                %s697 = sshrl.u32 %s615, 1
                %s698 = sand.u32 %s615, 1
                %s699 = smul.u32 %s697, 2
                %s700 = smul.u32 8, %s699
                %s701 = scalar_lea.vmem %s608, %s700 [#allocation2]
                %s702 = smul.u32 8, %s699
                %s703 = scalar_lea.vmem %s619, %s702
                // While loop
                $region90: #{tpu_custom_call.1} parent=81 // loop_pre_header
                  _
                $region91: #{tpu_custom_call.1} parent=81 // loop_header
                  %s705 = sphi 0, %s707
                  %p706 = scmp.ge.s32.totalorder %s705, %s698
                  %s710 = sphi 0, %s717
                  %s711 = sphi %s701, %s720
                  %s712 = sphi %s703, %s721
                $region92: #{tpu_custom_call.1} parent=81 // loop_header_branch
                  %709 = sbr.rel (%p706) target = $region96
                $region93: #{tpu_custom_call.1} parent=81 // loop_body
                  %v713 = vld [vmem:[%s711] sm:$0xff]
                  %714 = vst [vmem:[%s712] sm:$0xff] %v713
                  %s715 = sadd.s32 1, %s710
                  %p716 = scmp.ge.s32.totalorder %s715, %s698
                  %s717 = scalar_select %p716, 0, %s715
                  %s718 = smul.u32 %s717, 8
                  %s719 = smul.u32 %s717, 8
                  %s720 = scalar_lea.vmem %s701, %s718 [#allocation2]
                  %s721 = scalar_lea.vmem %s703, %s719
                $region94: #{tpu_custom_call.1} parent=81 // loop_footer
                  %s707 = sadd.s32 %s705, 1
                $region95: #{tpu_custom_call.1} parent=81 // loop_footer_branch
                  %704 = sbr.rel target = $region91
                $region96: #{tpu_custom_call.1} parent=81 // loop_exit
                  _
              $region82: #{tpu_custom_call.1} parent=59 // pred_fallthru
                _
              // Predicated region
              $region97: #{tpu_custom_call.1} parent=59 // pred_check
                _
              $region98: #{tpu_custom_call.1} parent=59 // pred_check_branch
                %723 = sbr.rel target = $region100
              $region99: #{tpu_custom_call.1} parent=59 // pred_region
                _
              $region100: #{tpu_custom_call.1} parent=59 // pred_fallthru
                _
            $region60: #{tpu_custom_call.1} parent=55 // pred_fallthru
              _
            // Predicated region
            $region61: #{tpu_custom_call.1} parent=55 // pred_check
              _
            $region62: #{tpu_custom_call.1} parent=55 // pred_check_branch
              %626 = sbr.rel target = $region64
            $region63: #{tpu_custom_call.1} parent=55 // pred_region
              %s628 = sshrl.u32 %s615, 1
              // While loop
              $region65: #{tpu_custom_call.1} parent=63 // loop_pre_header
                _
              $region66: #{tpu_custom_call.1} parent=63 // loop_header
                %s630 = sphi 0, %s632
                %p631 = scmp.ge.s32.totalorder %s630, %s628
                %s635 = sphi 0, %s644
                %s636 = sphi %s608, %s647
                %s637 = sphi %s619, %s648
              $region67: #{tpu_custom_call.1} parent=63 // loop_header_branch
                %634 = sbr.rel (%p631) target = $region71
              $region68: #{tpu_custom_call.1} parent=63 // loop_body
                %v638 = vld [vmem:[%s636] sm:$0xff]
                %639 = vst [vmem:[%s637] sm:$0xff] %v638
                %v640 = vld [vmem:[%s636 + $0x8] sm:$0xff]
                %641 = vst [vmem:[%s637 + $0x8] sm:$0xff] %v640
                %s642 = sadd.s32 1, %s635
                %p643 = scmp.ge.s32.totalorder %s642, %s628
                %s644 = scalar_select %p643, 0, %s642
                %s645 = smul.u32 %s644, 16
                %s646 = smul.u32 %s644, 16
                %s647 = scalar_lea.vmem %s608, %s645 [#allocation2]
                %s648 = scalar_lea.vmem %s619, %s646
              $region69: #{tpu_custom_call.1} parent=63 // loop_footer
                %s632 = sadd.s32 %s630, 1
              $region70: #{tpu_custom_call.1} parent=63 // loop_footer_branch
                %629 = sbr.rel target = $region66
              $region71: #{tpu_custom_call.1} parent=63 // loop_exit
                _
              %s649 = sshrl.u32 %s615, 1
              %s650 = sand.u32 %s615, 1
              %s651 = smul.u32 %s649, 2
              %s652 = smul.u32 8, %s651
              %s653 = scalar_lea.vmem %s608, %s652 [#allocation2]
              %s654 = smul.u32 8, %s651
              %s655 = scalar_lea.vmem %s619, %s654
              // While loop
              $region72: #{tpu_custom_call.1} parent=63 // loop_pre_header
                _
              $region73: #{tpu_custom_call.1} parent=63 // loop_header
                %s657 = sphi 0, %s659
                %p658 = scmp.ge.s32.totalorder %s657, %s650
                %s662 = sphi 0, %s669
                %s663 = sphi %s653, %s672
                %s664 = sphi %s655, %s673
              $region74: #{tpu_custom_call.1} parent=63 // loop_header_branch
                %661 = sbr.rel (%p658) target = $region78
              $region75: #{tpu_custom_call.1} parent=63 // loop_body
                %v665 = vld [vmem:[%s663] sm:$0xff]
                %666 = vst [vmem:[%s664] sm:$0xff] %v665
                %s667 = sadd.s32 1, %s662
                %p668 = scmp.ge.s32.totalorder %s667, %s650
                %s669 = scalar_select %p668, 0, %s667
                %s670 = smul.u32 %s669, 8
                %s671 = smul.u32 %s669, 8
                %s672 = scalar_lea.vmem %s653, %s670 [#allocation2]
                %s673 = scalar_lea.vmem %s655, %s671
              $region76: #{tpu_custom_call.1} parent=63 // loop_footer
                %s659 = sadd.s32 %s657, 1
              $region77: #{tpu_custom_call.1} parent=63 // loop_footer_branch
                %656 = sbr.rel target = $region73
              $region78: #{tpu_custom_call.1} parent=63 // loop_exit
                _
            $region64: #{tpu_custom_call.1} parent=55 // pred_fallthru
              _
          $region56: #{tpu_custom_call.1} parent=51 // pred_fallthru
            _
          %724 = vnop
        $region52: #{tpu_custom_call.1} parent=47 // pred_fallthru
          _
      $region48: #{tpu_custom_call.1} parent=5 // pred_fallthru
        _
      %p725 = scmp.le.s32.totalorder 2, %s13
      // Predicated region
      $region101: #{tpu_custom_call.1} parent=5 // pred_check
        %p726 = pneg %p725
      $region102: #{tpu_custom_call.1} parent=5 // pred_check_branch
        %728 = sbr.rel (%p726) target = $region104
      $region103: #{tpu_custom_call.1} parent=5 // pred_region
        %s729 = ssub.s32 %s13, 2
        // Predicated region
        $region105: #{tpu_custom_call.1} parent=103 // pred_check
          %p730 = pneg %p194
        $region106: #{tpu_custom_call.1} parent=103 // pred_check_branch
          %732 = sbr.rel (%p730) target = $region108
        $region107: #{tpu_custom_call.1} parent=103 // pred_region
          %s733 = sand.u32 %s179, 1
          %s734 = sand.u32 %s179, 1
          %s735 = smul.addr %s734, 16
          %s736 = scalar_lea.vmem [#allocation2], %s735
        $region108: #{tpu_custom_call.1} parent=103 // pred_fallthru
          _
      $region104: #{tpu_custom_call.1} parent=5 // pred_fallthru
        _
    $region6: #{tpu_custom_call.1} parent=1 // loop_footer
      %s17 = sadd.s32 1, %s13
    $region7: #{tpu_custom_call.1} parent=1 // loop_footer_branch
      %12 = sbr.rel target = $region3
    $region8: #{tpu_custom_call.1} parent=1 // loop_exit
      _

</llo_original>
